<compile_context>
chip_gen: v6e
topology: v6e:2x2x1
jax: 0.10.0
libtpu: 0.0.40
codegen_flags: <defaults>
</compile_context>

<pallas_src>
import functools
import math

import jax
import jax.numpy as jnp
from jax.experimental import pallas as pl
from jax.experimental.pallas import tpu as pltpu


# ----------------------------- Pallas kernel --------------------------------

def _layernorm(x, gamma, beta, eps=1e-5):
    # f32 elementwise path (VPU); biased variance as in torch LayerNorm.
    mu = jnp.mean(x, axis=-1, keepdims=True)
    var = jnp.mean((x - mu) ** 2, axis=-1, keepdims=True)
    return (x - mu) * jax.lax.rsqrt(var + eps) * gamma + beta


def transformer_layer_kernel(x_ref, ag_ref, ab_ref, wqkv_ref, wo_ref,
                             fg_ref, fb_ref, w1_ref, b1_ref, w2_ref, b2_ref,
                             o_ref, acc_ref, *, heads, dim_head):
    """One (batch element, layer) grid step. acc_ref keeps x resident in VMEM."""
    f32 = jnp.float32
    bf16 = jnp.bfloat16
    l = pl.program_id(1)
    last_l = pl.num_programs(1) - 1
    inner = heads * dim_head
    scale = dim_head ** -0.5

    @pl.when(l == 0)
    def _():
        acc_ref[...] = x_ref[0].astype(f32)

    x = acc_ref[...]                                   # (N, D) f32

    # ---------------- attention block: x <- Wout(attn(LN(x))) + x ----------
    ag = ag_ref[0]                                     # (1, D) hoisted
    ab = ab_ref[0]
    xn = _layernorm(x, ag, ab)

    # Fused QKV projection: one (N, D) @ (D, 3*inner) matmul, bf16 in / f32 acc.
    qkv = jnp.dot(xn.astype(bf16), wqkv_ref[0],
                  preferred_element_type=f32)          # (N, 3*inner)

    head_outs = []
    for h in range(heads):                             # short static unroll
        lo = h * dim_head
        hi = (h + 1) * dim_head
        q = qkv[:, lo:hi]
        k = qkv[:, inner + lo:inner + hi]
        v = qkv[:, 2 * inner + lo:2 * inner + hi]
        # q @ k^T per batch element: (N, N) — no block-diagonal mask needed.
        dots = jax.lax.dot_general(
            q.astype(bf16), k.astype(bf16), (((1,), (1,)), ((), ())),
            preferred_element_type=f32) * scale
        m = jnp.max(dots, axis=-1, keepdims=True)
        p = jnp.exp(dots - m)
        attn = p / jnp.sum(p, axis=-1, keepdims=True)  # exact (torch parity)
        head_outs.append(jnp.dot(attn.astype(bf16), v.astype(bf16),
                                 preferred_element_type=f32))
    out_cat = jnp.concatenate(head_outs, axis=-1)      # (N, inner)

    # Fused output projection: one (N, inner) @ (inner, D) matmul.
    proj = jnp.dot(out_cat.astype(bf16), wo_ref[0], preferred_element_type=f32)
    x = proj + x

    # ---------------- feed-forward block: x <- W2(relu(W1 LN(x)+b1))+b2 + x -
    fg = fg_ref[0]
    fb = fb_ref[0]
    b1 = b1_ref[0]                                     # (1, mlp)
    b2 = b2_ref[0]                                     # (1, D)
    xn = _layernorm(x, fg, fb)
    h1 = jnp.dot(xn.astype(bf16), w1_ref[0], preferred_element_type=f32) + b1
    h1 = jnp.maximum(h1, 0.0)                          # relu (f32, VPU)
    y = jnp.dot(h1.astype(bf16), w2_ref[0], preferred_element_type=f32) + b2
    x = y + x

    acc_ref[...] = x                                   # stay resident for l+1

    @pl.when(l == last_l)
    def _():
        o_ref[0] = x.astype(o_ref.dtype)


# ------------------------------ wrappers -------------------------------------

def _pack_params(params):
    """Stack per-layer params (leading layer axis); weights as bf16 MXU inputs."""
    bf16 = jnp.bfloat16
    stk = lambda k: jnp.stack([p[k] for p in params])
    return dict(
        attn_gamma=stk("attn_gamma"),              # (L, 1, D) f32
        attn_beta=stk("attn_beta"),
        wqkv=stk("wqkv").astype(bf16),             # (L, D, 3*inner)
        wout=stk("wout").astype(bf16),             # (L, inner, D)
        ff_gamma=stk("ff_gamma"),
        ff_beta=stk("ff_beta"),
        w1=stk("w1").astype(bf16),                 # (L, D, mlp)
        b1=stk("b1"),                              # (L, 1, mlp) f32
        w2=stk("w2").astype(bf16),                 # (L, mlp, D)
        b2=stk("b2"),                              # (L, 1, D) f32
    )


def transformer_forward(x, params, *, heads, dim_head):
    """return_attn=False forward path of the torch Transformer module."""
    B, N, D = x.shape
    depth = len(params)
    packed = _pack_params(params)

    inputs = [x,
              packed["attn_gamma"], packed["attn_beta"],
              packed["wqkv"], packed["wout"],
              packed["ff_gamma"], packed["ff_beta"],
              packed["w1"], packed["b1"], packed["w2"], packed["b2"]]

    def layer_spec(shape):
        nd = len(shape)
        return pl.BlockSpec((1,) + tuple(shape[1:]),
                            lambda b, l, _nd=nd: (l,) + (0,) * (_nd - 1))

    x_spec = pl.BlockSpec((1, N, D), lambda b, l: (b, 0, 0))
    out_spec = pl.BlockSpec((1, N, D), lambda b, l: (b, 0, 0))
    in_specs = [x_spec] + [layer_spec(a.shape) for a in inputs[1:]]

    # Explicit scoped-VMEM budget from the actual per-step footprint:
    #   double-buffered per-layer weight blocks + x/out blocks + resident scratch.
    weight_block_bytes = sum(
        math.prod(a.shape[1:]) * a.dtype.itemsize for a in inputs[1:])
    act_block_bytes = N * D * x.dtype.itemsize
    footprint = 2 * weight_block_bytes + 4 * act_block_bytes + N * D * 4
    vmem_limit = int(min(max(4 * footprint, 4 << 20), 96 << 20))

    kernel = functools.partial(transformer_layer_kernel,
                               heads=heads, dim_head=dim_head)

    out = pl.pallas_call(
        kernel,
        out_shape=jax.ShapeDtypeStruct((B, N, D), x.dtype),
        grid_spec=pltpu.PrefetchScalarGridSpec(
            num_scalar_prefetch=0,
            grid=(B, depth),                       # batch outer, layers inner
            in_specs=in_specs,
            out_specs=out_spec,
            scratch_shapes=[pltpu.VMEM((N, D), jnp.float32)],  # resident acts
        ),
        input_output_aliases={0: 0},               # reuse activation buffer
        compiler_params=pltpu.CompilerParams(
            dimension_semantics=("parallel", "arbitrary"),
            vmem_limit_bytes=vmem_limit),
    )(*inputs)
    return out


def init_params(key, dim, depth, heads, dim_head, mlp_dim):
    inner = heads * dim_head
    params = []
    for _ in range(depth):
        keys = jax.random.split(key, 5)
        key = keys[0]
        params.append(dict(
            # Attention
            attn_gamma=jnp.ones((1, dim), jnp.float32),
            attn_beta=jnp.zeros((1, dim), jnp.float32),
            wqkv=0.02 * jax.random.normal(keys[1], (dim, 3 * inner), jnp.float32),
            wout=0.02 * jax.random.normal(keys[2], (inner, dim), jnp.float32),
            # FeedForward
            ff_gamma=jnp.ones((1, dim), jnp.float32),
            ff_beta=jnp.zeros((1, dim), jnp.float32),
            w1=0.02 * jax.random.normal(keys[3], (dim, mlp_dim), jnp.float32),
            b1=jnp.zeros((1, mlp_dim), jnp.float32),
            w2=0.02 * jax.random.normal(keys[4], (mlp_dim, dim), jnp.float32),
            b2=jnp.zeros((1, dim), jnp.float32),
        ))
    return params


# ------------------------- pure-JAX reference --------------------------------

def _ref_forward(x, params, *, heads, dim_head):
    def ln(x, g, b, eps=1e-5):
        mu = jnp.mean(x, -1, keepdims=True)
        var = jnp.mean((x - mu) ** 2, -1, keepdims=True)
        return (x - mu) / jnp.sqrt(var + eps) * g + b

    inner = heads * dim_head
    for p in params:
        xn = ln(x, p["attn_gamma"][0], p["attn_beta"][0])
        qkv = xn @ p["wqkv"]
        q, k, v = jnp.split(qkv, 3, axis=-1)
        B, N, _ = q.shape
        def heads_split(t):
            return t.reshape(B, N, heads, dim_head).transpose(0, 2, 1, 3)
        q, k, v = map(heads_split, (q, k, v))
        dots = jnp.einsum("bhnd,bhmd->bhnm", q, k) * (dim_head ** -0.5)
        attn = jax.nn.softmax(dots, axis=-1)
        out = jnp.einsum("bhnm,bhmd->bhnd", attn, v)
        out = out.transpose(0, 2, 1, 3).reshape(B, N, inner)
        x = out @ p["wout"] + x
        xn = ln(x, p["ff_gamma"][0], p["ff_beta"][0])
        h = jnp.maximum(xn @ p["w1"] + p["b1"][0], 0.0)
        x = h @ p["w2"] + p["b2"][0] + x
    return x


if __name__ == "__main__":
    # Transformer(dim=32, depth=2, heads=4, dim_head=16, mlp_dim=64, activation='relu')
    B, N, dim = 2, 8, 32
    depth, heads, dim_head, mlp_dim = 2, 4, 16, 64

    key = jax.random.PRNGKey(0)
    kx, kp = jax.random.split(key)
    x = jax.random.normal(kx, (B, N, dim), jnp.float32)
    params = init_params(kp, dim, depth, heads, dim_head, mlp_dim)

    # reference first (kernel aliases/donates the x HBM buffer)
    ref = _ref_forward(x, params, heads=heads, dim_head=dim_head)

    out = transformer_forward(x, params, heads=heads, dim_head=dim_head)
    out = jax.block_until_ready(out)

    assert out.shape == (B, N, dim)
    # Tolerance covers bf16 MXU inputs (weights + matmul operands cast to bf16,
    # f32 accumulation); a logic bug produces errors orders of magnitude larger.
    assert jnp.allclose(out, ref, atol=2e-2, rtol=2e-2), (
        "mismatch vs reference: max abs err = "
        f"{float(jnp.max(jnp.abs(out - ref)))}")

    print("KERNEL_OK")
</pallas_src>

<mosaic_0001>
module attributes {stable_mosaic.version = 11 : i64} {
  func.func @transformer_layer_kernel(%arg0: i32, %arg1: i32, %arg2: memref<1x8x32xf32, #tpu.memory_space<vmem>>, %arg3: memref<1x1x32xf32, #tpu.memory_space<vmem>>, %arg4: memref<1x1x32xf32, #tpu.memory_space<vmem>>, %arg5: memref<1x32x192xbf16, #tpu.memory_space<vmem>>, %arg6: memref<1x64x32xbf16, #tpu.memory_space<vmem>>, %arg7: memref<1x1x32xf32, #tpu.memory_space<vmem>>, %arg8: memref<1x1x32xf32, #tpu.memory_space<vmem>>, %arg9: memref<1x32x64xbf16, #tpu.memory_space<vmem>>, %arg10: memref<1x1x64xf32, #tpu.memory_space<vmem>>, %arg11: memref<1x64x32xbf16, #tpu.memory_space<vmem>>, %arg12: memref<1x1x32xf32, #tpu.memory_space<vmem>>, %arg13: memref<1x8x32xf32, #tpu.memory_space<vmem>>, %arg14: memref<8x32xf32, #tpu.memory_space<vmem>>) attributes {dimension_semantics = [#tpu.dimension_semantics<parallel>, #tpu.dimension_semantics<arbitrary>], iteration_bounds = array<i64: 2, 2>, scalar_prefetch = 0 : i64, scratch_operands = 1 : i64, tpu.core_type = #tpu.core_type<tc>, window_params = [{transform_indices = @transform_0, window_bounds = array<i64: 1, 8, 32>}, {transform_indices = @transform_1, window_bounds = array<i64: 1, 1, 32>}, {transform_indices = @transform_2, window_bounds = array<i64: 1, 1, 32>}, {transform_indices = @transform_3, window_bounds = array<i64: 1, 32, 192>}, {transform_indices = @transform_4, window_bounds = array<i64: 1, 64, 32>}, {transform_indices = @transform_5, window_bounds = array<i64: 1, 1, 32>}, {transform_indices = @transform_6, window_bounds = array<i64: 1, 1, 32>}, {transform_indices = @transform_7, window_bounds = array<i64: 1, 32, 64>}, {transform_indices = @transform_8, window_bounds = array<i64: 1, 1, 64>}, {transform_indices = @transform_9, window_bounds = array<i64: 1, 64, 32>}, {transform_indices = @transform_10, window_bounds = array<i64: 1, 1, 32>}, {transform_indices = @transform_11, window_bounds = array<i64: 1, 8, 32>}]} {
    %c0_i32 = arith.constant 0 : i32
    %0 = arith.cmpi eq, %arg1, %c0_i32 : i32
    %1 = arith.extui %0 : i1 to i32
    %c0_i32_0 = arith.constant 0 : i32
    %2 = arith.cmpi ne, %1, %c0_i32_0 : i32
    scf.if %2 {
      %c0_69 = arith.constant 0 : index
      %c0_70 = arith.constant 0 : index
      %c0_71 = arith.constant 0 : index
      %169 = vector.load %arg2[%c0_69, %c0_70, %c0_71] : memref<1x8x32xf32, #tpu.memory_space<vmem>>, vector<1x8x32xf32>
      %170 = vector.shape_cast %169 : vector<1x8x32xf32> to vector<8x32xf32>
      %c0_72 = arith.constant 0 : index
      %c0_73 = arith.constant 0 : index
      %171 = vector.load %arg14[%c0_72, %c0_73] : memref<8x32xf32, #tpu.memory_space<vmem>>, vector<8x32xf32>
      tpu.vector_store %arg14[%c0_72, %c0_73], %170 {strides = array<i32>} : memref<8x32xf32, #tpu.memory_space<vmem>>, vector<8x32xf32>,
    } else {
    }
    %c0 = arith.constant 0 : index
    %c0_1 = arith.constant 0 : index
    %3 = vector.load %arg14[%c0, %c0_1] : memref<8x32xf32, #tpu.memory_space<vmem>>, vector<8x32xf32>
    %c0_2 = arith.constant 0 : index
    %c0_3 = arith.constant 0 : index
    %c0_4 = arith.constant 0 : index
    %4 = vector.load %arg3[%c0_2, %c0_3, %c0_4] : memref<1x1x32xf32, #tpu.memory_space<vmem>>, vector<1x1x32xf32>
    %5 = vector.shape_cast %4 : vector<1x1x32xf32> to vector<1x32xf32>
    %c0_5 = arith.constant 0 : index
    %c0_6 = arith.constant 0 : index
    %c0_7 = arith.constant 0 : index
    %6 = vector.load %arg4[%c0_5, %c0_6, %c0_7] : memref<1x1x32xf32, #tpu.memory_space<vmem>>, vector<1x1x32xf32>
    %7 = vector.shape_cast %6 : vector<1x1x32xf32> to vector<1x32xf32>
    %cst = arith.constant dense<0.000000e+00> : vector<8xf32>
    %8 = vector.multi_reduction <add>, %3, %cst [1] : vector<8x32xf32> to vector<8xf32>
    %9 = vector.shape_cast %8 : vector<8xf32> to vector<8x1xf32>
    %cst_8 = arith.constant 3.200000e+01 : f32
    %10 = vector.broadcast %cst_8 : f32 to vector<8x1xf32>
    %11 = arith.divf %9, %10 : vector<8x1xf32>
    %12 = vector.broadcast %11 : vector<8x1xf32> to vector<8x32xf32>
    %13 = arith.subf %3, %12 : vector<8x32xf32>
    %14 = arith.mulf %13, %13 : vector<8x32xf32>
    %cst_9 = arith.constant dense<0.000000e+00> : vector<8xf32>
    %15 = vector.multi_reduction <add>, %14, %cst_9 [1] : vector<8x32xf32> to vector<8xf32>
    %16 = vector.shape_cast %15 : vector<8xf32> to vector<8x1xf32>
    %cst_10 = arith.constant 3.200000e+01 : f32
    %17 = vector.broadcast %cst_10 : f32 to vector<8x1xf32>
    %18 = arith.divf %16, %17 : vector<8x1xf32>
    %19 = vector.broadcast %11 : vector<8x1xf32> to vector<8x32xf32>
    %20 = arith.subf %3, %19 : vector<8x32xf32>
    %cst_11 = arith.constant 9.99999974E-6 : f32
    %21 = vector.broadcast %cst_11 : f32 to vector<8x1xf32>
    %22 = arith.addf %18, %21 : vector<8x1xf32>
    %23 = math.rsqrt %22 : vector<8x1xf32>
    %24 = vector.broadcast %23 : vector<8x1xf32> to vector<8x32xf32>
    %25 = arith.mulf %20, %24 : vector<8x32xf32>
    %26 = vector.broadcast %5 : vector<1x32xf32> to vector<8x32xf32>
    %27 = arith.mulf %25, %26 : vector<8x32xf32>
    %28 = vector.broadcast %7 : vector<1x32xf32> to vector<8x32xf32>
    %29 = arith.addf %27, %28 : vector<8x32xf32>
    %30 = arith.truncf %29 : vector<8x32xf32> to vector<8x32xbf16>
    %c0_12 = arith.constant 0 : index
    %c0_13 = arith.constant 0 : index
    %c0_14 = arith.constant 0 : index
    %31 = vector.load %arg5[%c0_12, %c0_13, %c0_14] : memref<1x32x192xbf16, #tpu.memory_space<vmem>>, vector<1x32x192xbf16>
    %32 = vector.shape_cast %31 : vector<1x32x192xbf16> to vector<32x192xbf16>
    %cst_15 = arith.constant dense<0.000000e+00> : vector<8x192xf32>
    %33 = tpu.matmul %30, %32, %cst_15 {dimension_numbers = #tpu.dot_dimension_numbers<[1], [0], [0], [1], [0, 0, 1, 1], [], []>} : vector<8x32xbf16>, vector<32x192xbf16>, vector<8x192xf32> -> vector<8x192xf32>
    %34 = vector.extract_strided_slice %33 {offsets = [0, 0], sizes = [8, 16], strides = [1, 1]} : vector<8x192xf32> to vector<8x16xf32>
    %35 = vector.extract_strided_slice %33 {offsets = [0, 64], sizes = [8, 16], strides = [1, 1]} : vector<8x192xf32> to vector<8x16xf32>
    %36 = vector.extract_strided_slice %33 {offsets = [0, 128], sizes = [8, 16], strides = [1, 1]} : vector<8x192xf32> to vector<8x16xf32>
    %37 = arith.truncf %34 : vector<8x16xf32> to vector<8x16xbf16>
    %38 = arith.truncf %35 : vector<8x16xf32> to vector<8x16xbf16>
    %cst_16 = arith.constant dense<0.000000e+00> : vector<8x8xf32>
    %39 = tpu.matmul %37, %38, %cst_16 {dimension_numbers = #tpu.dot_dimension_numbers<[1], [1], [0], [0], [0, 0, 1, 0], [], []>} : vector<8x16xbf16>, vector<8x16xbf16>, vector<8x8xf32> -> vector<8x8xf32>
    %cst_17 = arith.constant 2.500000e-01 : f32
    %40 = vector.broadcast %cst_17 : f32 to vector<8x8xf32>
    %41 = arith.mulf %39, %40 : vector<8x8xf32>
    %cst_18 = arith.constant dense<0xFF800000> : vector<8xf32>
    %42 = vector.multi_reduction <maximumf>, %41, %cst_18 [1] : vector<8x8xf32> to vector<8xf32>
    %43 = vector.shape_cast %42 : vector<8xf32> to vector<8x1xf32>
    %44 = vector.broadcast %43 : vector<8x1xf32> to vector<8x8xf32>
    %45 = arith.subf %41, %44 : vector<8x8xf32>
    %46 = math.exp %45 : vector<8x8xf32>
    %cst_19 = arith.constant dense<0.000000e+00> : vector<8xf32>
    %47 = vector.multi_reduction <add>, %46, %cst_19 [1] : vector<8x8xf32> to vector<8xf32>
    %48 = vector.shape_cast %47 : vector<8xf32> to vector<8x1xf32>
    %49 = vector.broadcast %48 : vector<8x1xf32> to vector<8x8xf32>
    %50 = arith.divf %46, %49 : vector<8x8xf32>
    %51 = arith.truncf %50 : vector<8x8xf32> to vector<8x8xbf16>
    %52 = arith.truncf %36 : vector<8x16xf32> to vector<8x16xbf16>
    %cst_20 = arith.constant dense<0.000000e+00> : vector<8x16xf32>
    %53 = tpu.matmul %51, %52, %cst_20 {dimension_numbers = #tpu.dot_dimension_numbers<[1], [0], [0], [1], [0, 0, 1, 1], [], []>} : vector<8x8xbf16>, vector<8x16xbf16>, vector<8x16xf32> -> vector<8x16xf32>
    %54 = vector.extract_strided_slice %33 {offsets = [0, 16], sizes = [8, 16], strides = [1, 1]} : vector<8x192xf32> to vector<8x16xf32>
    %55 = vector.extract_strided_slice %33 {offsets = [0, 80], sizes = [8, 16], strides = [1, 1]} : vector<8x192xf32> to vector<8x16xf32>
    %56 = vector.extract_strided_slice %33 {offsets = [0, 144], sizes = [8, 16], strides = [1, 1]} : vector<8x192xf32> to vector<8x16xf32>
    %57 = arith.truncf %54 : vector<8x16xf32> to vector<8x16xbf16>
    %58 = arith.truncf %55 : vector<8x16xf32> to vector<8x16xbf16>
    %cst_21 = arith.constant dense<0.000000e+00> : vector<8x8xf32>
    %59 = tpu.matmul %57, %58, %cst_21 {dimension_numbers = #tpu.dot_dimension_numbers<[1], [1], [0], [0], [0, 0, 1, 0], [], []>} : vector<8x16xbf16>, vector<8x16xbf16>, vector<8x8xf32> -> vector<8x8xf32>
    %cst_22 = arith.constant 2.500000e-01 : f32
    %60 = vector.broadcast %cst_22 : f32 to vector<8x8xf32>
    %61 = arith.mulf %59, %60 : vector<8x8xf32>
    %cst_23 = arith.constant dense<0xFF800000> : vector<8xf32>
    %62 = vector.multi_reduction <maximumf>, %61, %cst_23 [1] : vector<8x8xf32> to vector<8xf32>
    %63 = vector.shape_cast %62 : vector<8xf32> to vector<8x1xf32>
    %64 = vector.broadcast %63 : vector<8x1xf32> to vector<8x8xf32>
    %65 = arith.subf %61, %64 : vector<8x8xf32>
    %66 = math.exp %65 : vector<8x8xf32>
    %cst_24 = arith.constant dense<0.000000e+00> : vector<8xf32>
    %67 = vector.multi_reduction <add>, %66, %cst_24 [1] : vector<8x8xf32> to vector<8xf32>
    %68 = vector.shape_cast %67 : vector<8xf32> to vector<8x1xf32>
    %69 = vector.broadcast %68 : vector<8x1xf32> to vector<8x8xf32>
    %70 = arith.divf %66, %69 : vector<8x8xf32>
    %71 = arith.truncf %70 : vector<8x8xf32> to vector<8x8xbf16>
    %72 = arith.truncf %56 : vector<8x16xf32> to vector<8x16xbf16>
    %cst_25 = arith.constant dense<0.000000e+00> : vector<8x16xf32>
    %73 = tpu.matmul %71, %72, %cst_25 {dimension_numbers = #tpu.dot_dimension_numbers<[1], [0], [0], [1], [0, 0, 1, 1], [], []>} : vector<8x8xbf16>, vector<8x16xbf16>, vector<8x16xf32> -> vector<8x16xf32>
    %74 = vector.extract_strided_slice %33 {offsets = [0, 32], sizes = [8, 16], strides = [1, 1]} : vector<8x192xf32> to vector<8x16xf32>
    %75 = vector.extract_strided_slice %33 {offsets = [0, 96], sizes = [8, 16], strides = [1, 1]} : vector<8x192xf32> to vector<8x16xf32>
    %76 = vector.extract_strided_slice %33 {offsets = [0, 160], sizes = [8, 16], strides = [1, 1]} : vector<8x192xf32> to vector<8x16xf32>
    %77 = arith.truncf %74 : vector<8x16xf32> to vector<8x16xbf16>
    %78 = arith.truncf %75 : vector<8x16xf32> to vector<8x16xbf16>
    %cst_26 = arith.constant dense<0.000000e+00> : vector<8x8xf32>
    %79 = tpu.matmul %77, %78, %cst_26 {dimension_numbers = #tpu.dot_dimension_numbers<[1], [1], [0], [0], [0, 0, 1, 0], [], []>} : vector<8x16xbf16>, vector<8x16xbf16>, vector<8x8xf32> -> vector<8x8xf32>
    %cst_27 = arith.constant 2.500000e-01 : f32
    %80 = vector.broadcast %cst_27 : f32 to vector<8x8xf32>
    %81 = arith.mulf %79, %80 : vector<8x8xf32>
    %cst_28 = arith.constant dense<0xFF800000> : vector<8xf32>
    %82 = vector.multi_reduction <maximumf>, %81, %cst_28 [1] : vector<8x8xf32> to vector<8xf32>
    %83 = vector.shape_cast %82 : vector<8xf32> to vector<8x1xf32>
    %84 = vector.broadcast %83 : vector<8x1xf32> to vector<8x8xf32>
    %85 = arith.subf %81, %84 : vector<8x8xf32>
    %86 = math.exp %85 : vector<8x8xf32>
    %cst_29 = arith.constant dense<0.000000e+00> : vector<8xf32>
    %87 = vector.multi_reduction <add>, %86, %cst_29 [1] : vector<8x8xf32> to vector<8xf32>
    %88 = vector.shape_cast %87 : vector<8xf32> to vector<8x1xf32>
    %89 = vector.broadcast %88 : vector<8x1xf32> to vector<8x8xf32>
    %90 = arith.divf %86, %89 : vector<8x8xf32>
    %91 = arith.truncf %90 : vector<8x8xf32> to vector<8x8xbf16>
    %92 = arith.truncf %76 : vector<8x16xf32> to vector<8x16xbf16>
    %cst_30 = arith.constant dense<0.000000e+00> : vector<8x16xf32>
    %93 = tpu.matmul %91, %92, %cst_30 {dimension_numbers = #tpu.dot_dimension_numbers<[1], [0], [0], [1], [0, 0, 1, 1], [], []>} : vector<8x8xbf16>, vector<8x16xbf16>, vector<8x16xf32> -> vector<8x16xf32>
    %94 = vector.extract_strided_slice %33 {offsets = [0, 48], sizes = [8, 16], strides = [1, 1]} : vector<8x192xf32> to vector<8x16xf32>
    %95 = vector.extract_strided_slice %33 {offsets = [0, 112], sizes = [8, 16], strides = [1, 1]} : vector<8x192xf32> to vector<8x16xf32>
    %96 = vector.extract_strided_slice %33 {offsets = [0, 176], sizes = [8, 16], strides = [1, 1]} : vector<8x192xf32> to vector<8x16xf32>
    %97 = arith.truncf %94 : vector<8x16xf32> to vector<8x16xbf16>
    %98 = arith.truncf %95 : vector<8x16xf32> to vector<8x16xbf16>
    %cst_31 = arith.constant dense<0.000000e+00> : vector<8x8xf32>
    %99 = tpu.matmul %97, %98, %cst_31 {dimension_numbers = #tpu.dot_dimension_numbers<[1], [1], [0], [0], [0, 0, 1, 0], [], []>} : vector<8x16xbf16>, vector<8x16xbf16>, vector<8x8xf32> -> vector<8x8xf32>
    %cst_32 = arith.constant 2.500000e-01 : f32
    %100 = vector.broadcast %cst_32 : f32 to vector<8x8xf32>
    %101 = arith.mulf %99, %100 : vector<8x8xf32>
    %cst_33 = arith.constant dense<0xFF800000> : vector<8xf32>
    %102 = vector.multi_reduction <maximumf>, %101, %cst_33 [1] : vector<8x8xf32> to vector<8xf32>
    %103 = vector.shape_cast %102 : vector<8xf32> to vector<8x1xf32>
    %104 = vector.broadcast %103 : vector<8x1xf32> to vector<8x8xf32>
    %105 = arith.subf %101, %104 : vector<8x8xf32>
    %106 = math.exp %105 : vector<8x8xf32>
    %cst_34 = arith.constant dense<0.000000e+00> : vector<8xf32>
    %107 = vector.multi_reduction <add>, %106, %cst_34 [1] : vector<8x8xf32> to vector<8xf32>
    %108 = vector.shape_cast %107 : vector<8xf32> to vector<8x1xf32>
    %109 = vector.broadcast %108 : vector<8x1xf32> to vector<8x8xf32>
    %110 = arith.divf %106, %109 : vector<8x8xf32>
    %111 = arith.truncf %110 : vector<8x8xf32> to vector<8x8xbf16>
    %112 = arith.truncf %96 : vector<8x16xf32> to vector<8x16xbf16>
    %cst_35 = arith.constant dense<0.000000e+00> : vector<8x16xf32>
    %113 = tpu.matmul %111, %112, %cst_35 {dimension_numbers = #tpu.dot_dimension_numbers<[1], [0], [0], [1], [0, 0, 1, 1], [], []>} : vector<8x8xbf16>, vector<8x16xbf16>, vector<8x16xf32> -> vector<8x16xf32>
    %114 = tpu.concatenate %53, %73, %93, %113 in 1 : vector<8x16xf32>, vector<8x16xf32>, vector<8x16xf32>, vector<8x16xf32> -> vector<8x64xf32>
    %115 = arith.truncf %114 : vector<8x64xf32> to vector<8x64xbf16>
    %c0_36 = arith.constant 0 : index
    %c0_37 = arith.constant 0 : index
    %c0_38 = arith.constant 0 : index
    %116 = vector.load %arg6[%c0_36, %c0_37, %c0_38] : memref<1x64x32xbf16, #tpu.memory_space<vmem>>, vector<1x64x32xbf16>
    %117 = vector.shape_cast %116 : vector<1x64x32xbf16> to vector<64x32xbf16>
    %cst_39 = arith.constant dense<0.000000e+00> : vector<8x32xf32>
    %118 = tpu.matmul %115, %117, %cst_39 {dimension_numbers = #tpu.dot_dimension_numbers<[1], [0], [0], [1], [0, 0, 1, 1], [], []>} : vector<8x64xbf16>, vector<64x32xbf16>, vector<8x32xf32> -> vector<8x32xf32>
    %119 = arith.addf %118, %3 : vector<8x32xf32>
    %c0_40 = arith.constant 0 : index
    %c0_41 = arith.constant 0 : index
    %c0_42 = arith.constant 0 : index
    %120 = vector.load %arg7[%c0_40, %c0_41, %c0_42] : memref<1x1x32xf32, #tpu.memory_space<vmem>>, vector<1x1x32xf32>
    %121 = vector.shape_cast %120 : vector<1x1x32xf32> to vector<1x32xf32>
    %c0_43 = arith.constant 0 : index
    %c0_44 = arith.constant 0 : index
    %c0_45 = arith.constant 0 : index
    %122 = vector.load %arg8[%c0_43, %c0_44, %c0_45] : memref<1x1x32xf32, #tpu.memory_space<vmem>>, vector<1x1x32xf32>
    %123 = vector.shape_cast %122 : vector<1x1x32xf32> to vector<1x32xf32>
    %c0_46 = arith.constant 0 : index
    %c0_47 = arith.constant 0 : index
    %c0_48 = arith.constant 0 : index
    %124 = vector.load %arg10[%c0_46, %c0_47, %c0_48] : memref<1x1x64xf32, #tpu.memory_space<vmem>>, vector<1x1x64xf32>
    %125 = vector.shape_cast %124 : vector<1x1x64xf32> to vector<1x64xf32>
    %c0_49 = arith.constant 0 : index
    %c0_50 = arith.constant 0 : index
    %c0_51 = arith.constant 0 : index
    %126 = vector.load %arg12[%c0_49, %c0_50, %c0_51] : memref<1x1x32xf32, #tpu.memory_space<vmem>>, vector<1x1x32xf32>
    %127 = vector.shape_cast %126 : vector<1x1x32xf32> to vector<1x32xf32>
    %cst_52 = arith.constant dense<0.000000e+00> : vector<8xf32>
    %128 = vector.multi_reduction <add>, %119, %cst_52 [1] : vector<8x32xf32> to vector<8xf32>
    %129 = vector.shape_cast %128 : vector<8xf32> to vector<8x1xf32>
    %cst_53 = arith.constant 3.200000e+01 : f32
    %130 = vector.broadcast %cst_53 : f32 to vector<8x1xf32>
    %131 = arith.divf %129, %130 : vector<8x1xf32>
    %132 = vector.broadcast %131 : vector<8x1xf32> to vector<8x32xf32>
    %133 = arith.subf %119, %132 : vector<8x32xf32>
    %134 = arith.mulf %133, %133 : vector<8x32xf32>
    %cst_54 = arith.constant dense<0.000000e+00> : vector<8xf32>
    %135 = vector.multi_reduction <add>, %134, %cst_54 [1] : vector<8x32xf32> to vector<8xf32>
    %136 = vector.shape_cast %135 : vector<8xf32> to vector<8x1xf32>
    %cst_55 = arith.constant 3.200000e+01 : f32
    %137 = vector.broadcast %cst_55 : f32 to vector<8x1xf32>
    %138 = arith.divf %136, %137 : vector<8x1xf32>
    %139 = vector.broadcast %131 : vector<8x1xf32> to vector<8x32xf32>
    %140 = arith.subf %119, %139 : vector<8x32xf32>
    %cst_56 = arith.constant 9.99999974E-6 : f32
    %141 = vector.broadcast %cst_56 : f32 to vector<8x1xf32>
    %142 = arith.addf %138, %141 : vector<8x1xf32>
    %143 = math.rsqrt %142 : vector<8x1xf32>
    %144 = vector.broadcast %143 : vector<8x1xf32> to vector<8x32xf32>
    %145 = arith.mulf %140, %144 : vector<8x32xf32>
    %146 = vector.broadcast %121 : vector<1x32xf32> to vector<8x32xf32>
    %147 = arith.mulf %145, %146 : vector<8x32xf32>
    %148 = vector.broadcast %123 : vector<1x32xf32> to vector<8x32xf32>
    %149 = arith.addf %147, %148 : vector<8x32xf32>
    %150 = arith.truncf %149 : vector<8x32xf32> to vector<8x32xbf16>
    %c0_57 = arith.constant 0 : index
    %c0_58 = arith.constant 0 : index
    %c0_59 = arith.constant 0 : index
    %151 = vector.load %arg9[%c0_57, %c0_58, %c0_59] : memref<1x32x64xbf16, #tpu.memory_space<vmem>>, vector<1x32x64xbf16>
    %152 = vector.shape_cast %151 : vector<1x32x64xbf16> to vector<32x64xbf16>
    %cst_60 = arith.constant dense<0.000000e+00> : vector<8x64xf32>
    %153 = tpu.matmul %150, %152, %cst_60 {dimension_numbers = #tpu.dot_dimension_numbers<[1], [0], [0], [1], [0, 0, 1, 1], [], []>} : vector<8x32xbf16>, vector<32x64xbf16>, vector<8x64xf32> -> vector<8x64xf32>
    %154 = vector.broadcast %125 : vector<1x64xf32> to vector<8x64xf32>
    %155 = arith.addf %153, %154 : vector<8x64xf32>
    %cst_61 = arith.constant 0.000000e+00 : f32
    %156 = vector.broadcast %cst_61 : f32 to vector<8x64xf32>
    %157 = arith.maximumf %155, %156 : vector<8x64xf32>
    %158 = arith.truncf %157 : vector<8x64xf32> to vector<8x64xbf16>
    %c0_62 = arith.constant 0 : index
    %c0_63 = arith.constant 0 : index
    %c0_64 = arith.constant 0 : index
    %159 = vector.load %arg11[%c0_62, %c0_63, %c0_64] : memref<1x64x32xbf16, #tpu.memory_space<vmem>>, vector<1x64x32xbf16>
    %160 = vector.shape_cast %159 : vector<1x64x32xbf16> to vector<64x32xbf16>
    %cst_65 = arith.constant dense<0.000000e+00> : vector<8x32xf32>
    %161 = tpu.matmul %158, %160, %cst_65 {dimension_numbers = #tpu.dot_dimension_numbers<[1], [0], [0], [1], [0, 0, 1, 1], [], []>} : vector<8x64xbf16>, vector<64x32xbf16>, vector<8x32xf32> -> vector<8x32xf32>
    %162 = vector.broadcast %127 : vector<1x32xf32> to vector<8x32xf32>
    %163 = arith.addf %161, %162 : vector<8x32xf32>
    %164 = arith.addf %163, %119 : vector<8x32xf32>
    %c0_66 = arith.constant 0 : index
    %c0_67 = arith.constant 0 : index
    %165 = vector.load %arg14[%c0_66, %c0_67] : memref<8x32xf32, #tpu.memory_space<vmem>>, vector<8x32xf32>
    tpu.vector_store %arg14[%c0_66, %c0_67], %164 {strides = array<i32>} : memref<8x32xf32, #tpu.memory_space<vmem>>, vector<8x32xf32>,
    %c1_i32 = arith.constant 1 : i32
    %166 = arith.cmpi eq, %arg1, %c1_i32 : i32
    %167 = arith.extui %166 : i1 to i32
    %c0_i32_68 = arith.constant 0 : i32
    %168 = arith.cmpi ne, %167, %c0_i32_68 : i32
    scf.if %168 {
      %c0_69 = arith.constant 0 : index
      %c0_70 = arith.constant 0 : index
      %c0_71 = arith.constant 0 : index
      %169 = vector.load %arg13[%c0_69, %c0_70, %c0_71] : memref<1x8x32xf32, #tpu.memory_space<vmem>>, vector<1x8x32xf32>
      %170 = vector.shape_cast %169 : vector<1x8x32xf32> to vector<8x32xf32>
      %171 = vector.shape_cast %164 : vector<8x32xf32> to vector<1x8x32xf32>
      tpu.vector_store %arg13[%c0_69, %c0_70, %c0_71], %171 {strides = array<i32>} : memref<1x8x32xf32, #tpu.memory_space<vmem>>, vector<1x8x32xf32>,
    } else {
    }
    return
  }
  func.func @transform_0(%arg0: i32, %arg1: i32) -> (i32, i32, i32) {
    %c0_i32 = arith.constant 0 : i32
    %c0_i32_0 = arith.constant 0 : i32
    %c0_i32_1 = arith.constant 0 : i32
    return %arg0, %c0_i32, %c0_i32_0 : i32, i32, i32
  }
  func.func @transform_1(%arg0: i32, %arg1: i32) -> (i32, i32, i32) {
    %c0_i32 = arith.constant 0 : i32
    %c0_i32_0 = arith.constant 0 : i32
    %c0_i32_1 = arith.constant 0 : i32
    return %arg1, %c0_i32, %c0_i32_0 : i32, i32, i32
  }
  func.func @transform_2(%arg0: i32, %arg1: i32) -> (i32, i32, i32) {
    %c0_i32 = arith.constant 0 : i32
    %c0_i32_0 = arith.constant 0 : i32
    %c0_i32_1 = arith.constant 0 : i32
    return %arg1, %c0_i32, %c0_i32_0 : i32, i32, i32
  }
  func.func @transform_3(%arg0: i32, %arg1: i32) -> (i32, i32, i32) {
    %c0_i32 = arith.constant 0 : i32
    %c0_i32_0 = arith.constant 0 : i32
    %c0_i32_1 = arith.constant 0 : i32
    return %arg1, %c0_i32, %c0_i32_0 : i32, i32, i32
  }
  func.func @transform_4(%arg0: i32, %arg1: i32) -> (i32, i32, i32) {
    %c0_i32 = arith.constant 0 : i32
    %c0_i32_0 = arith.constant 0 : i32
    %c0_i32_1 = arith.constant 0 : i32
    return %arg1, %c0_i32, %c0_i32_0 : i32, i32, i32
  }
  func.func @transform_5(%arg0: i32, %arg1: i32) -> (i32, i32, i32) {
    %c0_i32 = arith.constant 0 : i32
    %c0_i32_0 = arith.constant 0 : i32
    %c0_i32_1 = arith.constant 0 : i32
    return %arg1, %c0_i32, %c0_i32_0 : i32, i32, i32
  }
  func.func @transform_6(%arg0: i32, %arg1: i32) -> (i32, i32, i32) {
    %c0_i32 = arith.constant 0 : i32
    %c0_i32_0 = arith.constant 0 : i32
    %c0_i32_1 = arith.constant 0 : i32
    return %arg1, %c0_i32, %c0_i32_0 : i32, i32, i32
  }
  func.func @transform_7(%arg0: i32, %arg1: i32) -> (i32, i32, i32) {
    %c0_i32 = arith.constant 0 : i32
    %c0_i32_0 = arith.constant 0 : i32
    %c0_i32_1 = arith.constant 0 : i32
    return %arg1, %c0_i32, %c0_i32_0 : i32, i32, i32
  }
  func.func @transform_8(%arg0: i32, %arg1: i32) -> (i32, i32, i32) {
    %c0_i32 = arith.constant 0 : i32
    %c0_i32_0 = arith.constant 0 : i32
    %c0_i32_1 = arith.constant 0 : i32
    return %arg1, %c0_i32, %c0_i32_0 : i32, i32, i32
  }
  func.func @transform_9(%arg0: i32, %arg1: i32) -> (i32, i32, i32) {
    %c0_i32 = arith.constant 0 : i32
    %c0_i32_0 = arith.constant 0 : i32
    %c0_i32_1 = arith.constant 0 : i32
    return %arg1, %c0_i32, %c0_i32_0 : i32, i32, i32
  }
  func.func @transform_10(%arg0: i32, %arg1: i32) -> (i32, i32, i32) {
    %c0_i32 = arith.constant 0 : i32
    %c0_i32_0 = arith.constant 0 : i32
    %c0_i32_1 = arith.constant 0 : i32
    return %arg1, %c0_i32, %c0_i32_0 : i32, i32, i32
  }
  func.func @transform_11(%arg0: i32, %arg1: i32) -> (i32, i32, i32) {
    %c0_i32 = arith.constant 0 : i32
    %c0_i32_0 = arith.constant 0 : i32
    %c0_i32_1 = arith.constant 0 : i32
    return %arg0, %c0_i32, %c0_i32_0 : i32, i32, i32
  }
}

</mosaic_0001>

<llo_original>
// kernel: tpu_custom_call.1
$region0: #{tpu_custom_call.1}
  #allocation0 [shape = 'u32[]', space=smem, size = 0x4, offset = 0x4, fixed_abs, tag = 'smem constant byte address 0x4 - core index']
  #allocation1 [shape = 'u32[144,128]{1,0:T(1,128)}', space=vmem, size = 0x12000, scoped, tag = 'internal scratch']
  #allocation2 [shape = 'f32[8,32]{1,0:T(8,128)}', space=vmem, size = 0x1000, scoped, tag = 'scratch operand']
  %s0 = inlined_call_operand.hbm [shape: f32[2,8,32], index: 0, kind: input, shape index: {}, may-alias: {0,11}]
  %s1 = inlined_call_operand.vmem [shape: f32[2,1,32], index: 1, kind: input, shape index: {}]
  %s2 = inlined_call_operand.vmem [shape: f32[2,1,32], index: 2, kind: input, shape index: {}]
  %s3 = inlined_call_operand.vmem [shape: bf16[2,32,192], index: 3, kind: input, shape index: {}]
  %s4 = inlined_call_operand.vmem [shape: bf16[2,64,32], index: 4, kind: input, shape index: {}]
  %s5 = inlined_call_operand.vmem [shape: f32[2,1,32], index: 5, kind: input, shape index: {}]
  %s6 = inlined_call_operand.vmem [shape: f32[2,1,32], index: 6, kind: input, shape index: {}]
  %s7 = inlined_call_operand.vmem [shape: bf16[2,32,64], index: 7, kind: input, shape index: {}]
  %s8 = inlined_call_operand.vmem [shape: f32[2,1,64], index: 8, kind: input, shape index: {}]
  %s9 = inlined_call_operand.vmem [shape: bf16[2,64,32], index: 9, kind: input, shape index: {}]
  %s10 = inlined_call_operand.vmem [shape: f32[2,1,32], index: 10, kind: input, shape index: {}]
  %s11 = inlined_call_operand.hbm [shape: f32[2,8,32], index: 11, kind: output, shape index: {}, may-alias: {0,11}]
  %s12 = sld [smem:[#allocation0]]
  $region89: #{tpu_custom_call.1} parent=0
    _
  %s14 = ssub.s32 1, %s12
  %s15 = scalar_select 0, %s14, %s12
  $region1: #{tpu_custom_call.1} parent=0
    #allocation3 [shape = 'u8[8192]{0}', space=vmem, size = 0x2000, scoped, tag = 'input window, operand 0']
    #allocation4 [shape = 's32[2]{0}', space=sflag, size = 0x8, scoped, tag = 'scoped memory for tpu_custom_call.1']
    #allocation5 [shape = 's32[2]{0}', space=sflag, size = 0x8, scoped, tag = 'scoped memory for tpu_custom_call.1']
    #allocation6 [shape = 'u8[8192]{0}', space=vmem, size = 0x2000, scoped, tag = 'output window, operand 0']
    %16 = vsyncpa [#allocation4], 0
    %s17 = scalar_lea.sflag [#allocation4], 1
    %18 = vsyncpa %s17, 0
    %19 = vsyncpa [#allocation5], 0
    %s20 = scalar_lea.sflag [#allocation5], 1
    %21 = vsyncpa %s20, 0
    loop: start=0, step=1, limit=6
    $region2: #{tpu_custom_call.1} parent=1 // loop_pre_header
      _
    $region3: #{tpu_custom_call.1} parent=1 // loop_header
      %s23 = sphi 0, %s27
      %p24 = scmp.ge.s32.totalorder %s23, 6
      %s30 = sphi 0, %s42
      %s31 = sphi 0, %s38
      %s32 = sphi 0, %s30
      %s33 = sphi 0, %s31
      %s34 = sphi 0, %s32
      %s35 = sphi 0, %s33
      %s45 = sphi 0, %s47
      %s48 = sphi 0, %s45
      %s49 = sphi 0, %s48
      %s65 = sphi 0, %s49
      %s71 = sphi 0, %s73
      %s74 = sphi 0, %s71
      %s75 = sphi 0, %s74
      %s91 = sphi 0, %s75
      %s97 = sphi 0, %s99
      %s100 = sphi 0, %s97
      %s101 = sphi 0, %s100
      %s117 = sphi 0, %s101
      %s123 = sphi 0, %s125
      %s126 = sphi 0, %s123
      %s127 = sphi 0, %s126
      %s143 = sphi 0, %s127
      %s149 = sphi 0, %s151
      %s152 = sphi 0, %s149
      %s153 = sphi 0, %s152
      %s169 = sphi 0, %s153
      %s175 = sphi 0, %s177
      %s178 = sphi 0, %s175
      %s179 = sphi 0, %s178
      %s195 = sphi 0, %s179
      %s201 = sphi 0, %s203
      %s204 = sphi 0, %s201
      %s205 = sphi 0, %s204
      %s221 = sphi 0, %s205
      %s227 = sphi 0, %s229
      %s230 = sphi 0, %s227
      %s231 = sphi 0, %s230
      %s247 = sphi 0, %s231
      %s253 = sphi 0, %s255
      %s256 = sphi 0, %s253
      %s257 = sphi 0, %s256
      %s273 = sphi 0, %s257
      %s279 = sphi 0, %s281
      %s282 = sphi 0, %s279
      %s283 = sphi 0, %s282
      %s299 = sphi 0, %s283
      %s305 = sphi 0, %s307
      %s308 = sphi 0, %s305
      %s309 = sphi 0, %s308
      %s325 = sphi 0, %s309
      %s331 = sphi 0, %s333
      %s334 = sphi 0, %s331
      %s335 = sphi 0, %s334
      %s351 = sphi 0, %s335
    $region4: #{tpu_custom_call.1} parent=1 // loop_header_branch
      %26 = sbr.rel (%p24) target = $region8
    $region5: #{tpu_custom_call.1} parent=1 // loop_body
      %s28 = ssub.s32 %s23, 1
      %s29 = ssub.s32 %s23, 2
      %s36 = sadd.s32 1, %s31
      %p37 = scmp.ge.s32.totalorder %s36, 2
      %s38 = scalar_select %p37, 0, %s36
      %s39 = sadd.s32 1, %s30
      %s40 = scalar_select %p37, %s39, %s30
      %p41 = scmp.ge.s32.totalorder %s40, 2
      %s42 = scalar_select %p41, 0, %s40
      %s43 = ssub.s32 %s30, %s42
      %p44 = scmp.eq.s32.totalorder %s43, 0
      %s46 = sadd.s32 %s45, 1
      %s47 = scalar_select %p44, %s45, %s46
      %p50 = pneg %p44
      %p51 = scmp.eq.s32.totalorder %s23, 3
      %p52 = por %p50, %p51
      %p53 = scmp.ne.s32.totalorder %s45, %s48
      %p54 = scmp.eq.s32.totalorder %s23, 0
      %p55 = por %p53, %p54
      %p56 = scmp.ne.s32.totalorder %s45, %s48
      %p57 = scmp.eq.s32.totalorder %s28, 3
      %p58 = por %p56, %p57
      %p59 = scmp.ne.s32.totalorder %s48, %s49
      %p60 = scmp.eq.s32.totalorder %s28, 0
      %p61 = por %p59, %p60
      %p62 = scmp.ne.s32.totalorder %s48, %s49
      %p63 = scmp.eq.s32.totalorder %s29, 3
      %p64 = por %p62, %p63
      %p66 = scmp.ne.s32.totalorder %s49, %s65
      %p67 = scmp.eq.s32.totalorder %s29, 0
      %p68 = por %p66, %p67
      %s69 = ssub.s32 %s31, %s38
      %p70 = scmp.eq.s32.totalorder %s69, 0
      %s72 = sadd.s32 %s71, 1
      %s73 = scalar_select %p70, %s71, %s72
      %p76 = pneg %p70
      %p77 = scmp.eq.s32.totalorder %s23, 3
      %p78 = por %p76, %p77
      %p79 = scmp.ne.s32.totalorder %s71, %s74
      %p80 = scmp.eq.s32.totalorder %s23, 0
      %p81 = por %p79, %p80
      %p82 = scmp.ne.s32.totalorder %s71, %s74
      %p83 = scmp.eq.s32.totalorder %s28, 3
      %p84 = por %p82, %p83
      %p85 = scmp.ne.s32.totalorder %s74, %s75
      %p86 = scmp.eq.s32.totalorder %s28, 0
      %p87 = por %p85, %p86
      %p88 = scmp.ne.s32.totalorder %s74, %s75
      %p89 = scmp.eq.s32.totalorder %s29, 3
      %p90 = por %p88, %p89
      %p92 = scmp.ne.s32.totalorder %s75, %s91
      %p93 = scmp.eq.s32.totalorder %s29, 0
      %p94 = por %p92, %p93
      %s95 = ssub.s32 %s31, %s38
      %p96 = scmp.eq.s32.totalorder %s95, 0
      %s98 = sadd.s32 %s97, 1
      %s99 = scalar_select %p96, %s97, %s98
      %p102 = pneg %p96
      %p103 = scmp.eq.s32.totalorder %s23, 3
      %p104 = por %p102, %p103
      %p105 = scmp.ne.s32.totalorder %s97, %s100
      %p106 = scmp.eq.s32.totalorder %s23, 0
      %p107 = por %p105, %p106
      %p108 = scmp.ne.s32.totalorder %s97, %s100
      %p109 = scmp.eq.s32.totalorder %s28, 3
      %p110 = por %p108, %p109
      %p111 = scmp.ne.s32.totalorder %s100, %s101
      %p112 = scmp.eq.s32.totalorder %s28, 0
      %p113 = por %p111, %p112
      %p114 = scmp.ne.s32.totalorder %s100, %s101
      %p115 = scmp.eq.s32.totalorder %s29, 3
      %p116 = por %p114, %p115
      %p118 = scmp.ne.s32.totalorder %s101, %s117
      %p119 = scmp.eq.s32.totalorder %s29, 0
      %p120 = por %p118, %p119
      %s121 = ssub.s32 %s31, %s38
      %p122 = scmp.eq.s32.totalorder %s121, 0
      %s124 = sadd.s32 %s123, 1
      %s125 = scalar_select %p122, %s123, %s124
      %p128 = pneg %p122
      %p129 = scmp.eq.s32.totalorder %s23, 3
      %p130 = por %p128, %p129
      %p131 = scmp.ne.s32.totalorder %s123, %s126
      %p132 = scmp.eq.s32.totalorder %s23, 0
      %p133 = por %p131, %p132
      %p134 = scmp.ne.s32.totalorder %s123, %s126
      %p135 = scmp.eq.s32.totalorder %s28, 3
      %p136 = por %p134, %p135
      %p137 = scmp.ne.s32.totalorder %s126, %s127
      %p138 = scmp.eq.s32.totalorder %s28, 0
      %p139 = por %p137, %p138
      %p140 = scmp.ne.s32.totalorder %s126, %s127
      %p141 = scmp.eq.s32.totalorder %s29, 3
      %p142 = por %p140, %p141
      %p144 = scmp.ne.s32.totalorder %s127, %s143
      %p145 = scmp.eq.s32.totalorder %s29, 0
      %p146 = por %p144, %p145
      %s147 = ssub.s32 %s31, %s38
      %p148 = scmp.eq.s32.totalorder %s147, 0
      %s150 = sadd.s32 %s149, 1
      %s151 = scalar_select %p148, %s149, %s150
      %p154 = pneg %p148
      %p155 = scmp.eq.s32.totalorder %s23, 3
      %p156 = por %p154, %p155
      %p157 = scmp.ne.s32.totalorder %s149, %s152
      %p158 = scmp.eq.s32.totalorder %s23, 0
      %p159 = por %p157, %p158
      %p160 = scmp.ne.s32.totalorder %s149, %s152
      %p161 = scmp.eq.s32.totalorder %s28, 3
      %p162 = por %p160, %p161
      %p163 = scmp.ne.s32.totalorder %s152, %s153
      %p164 = scmp.eq.s32.totalorder %s28, 0
      %p165 = por %p163, %p164
      %p166 = scmp.ne.s32.totalorder %s152, %s153
      %p167 = scmp.eq.s32.totalorder %s29, 3
      %p168 = por %p166, %p167
      %p170 = scmp.ne.s32.totalorder %s153, %s169
      %p171 = scmp.eq.s32.totalorder %s29, 0
      %p172 = por %p170, %p171
      %s173 = ssub.s32 %s31, %s38
      %p174 = scmp.eq.s32.totalorder %s173, 0
      %s176 = sadd.s32 %s175, 1
      %s177 = scalar_select %p174, %s175, %s176
      %p180 = pneg %p174
      %p181 = scmp.eq.s32.totalorder %s23, 3
      %p182 = por %p180, %p181
      %p183 = scmp.ne.s32.totalorder %s175, %s178
      %p184 = scmp.eq.s32.totalorder %s23, 0
      %p185 = por %p183, %p184
      %p186 = scmp.ne.s32.totalorder %s175, %s178
      %p187 = scmp.eq.s32.totalorder %s28, 3
      %p188 = por %p186, %p187
      %p189 = scmp.ne.s32.totalorder %s178, %s179
      %p190 = scmp.eq.s32.totalorder %s28, 0
      %p191 = por %p189, %p190
      %p192 = scmp.ne.s32.totalorder %s178, %s179
      %p193 = scmp.eq.s32.totalorder %s29, 3
      %p194 = por %p192, %p193
      %p196 = scmp.ne.s32.totalorder %s179, %s195
      %p197 = scmp.eq.s32.totalorder %s29, 0
      %p198 = por %p196, %p197
      %s199 = ssub.s32 %s31, %s38
      %p200 = scmp.eq.s32.totalorder %s199, 0
      %s202 = sadd.s32 %s201, 1
      %s203 = scalar_select %p200, %s201, %s202
      %p206 = pneg %p200
      %p207 = scmp.eq.s32.totalorder %s23, 3
      %p208 = por %p206, %p207
      %p209 = scmp.ne.s32.totalorder %s201, %s204
      %p210 = scmp.eq.s32.totalorder %s23, 0
      %p211 = por %p209, %p210
      %p212 = scmp.ne.s32.totalorder %s201, %s204
      %p213 = scmp.eq.s32.totalorder %s28, 3
      %p214 = por %p212, %p213
      %p215 = scmp.ne.s32.totalorder %s204, %s205
      %p216 = scmp.eq.s32.totalorder %s28, 0
      %p217 = por %p215, %p216
      %p218 = scmp.ne.s32.totalorder %s204, %s205
      %p219 = scmp.eq.s32.totalorder %s29, 3
      %p220 = por %p218, %p219
      %p222 = scmp.ne.s32.totalorder %s205, %s221
      %p223 = scmp.eq.s32.totalorder %s29, 0
      %p224 = por %p222, %p223
      %s225 = ssub.s32 %s31, %s38
      %p226 = scmp.eq.s32.totalorder %s225, 0
      %s228 = sadd.s32 %s227, 1
      %s229 = scalar_select %p226, %s227, %s228
      %p232 = pneg %p226
      %p233 = scmp.eq.s32.totalorder %s23, 3
      %p234 = por %p232, %p233
      %p235 = scmp.ne.s32.totalorder %s227, %s230
      %p236 = scmp.eq.s32.totalorder %s23, 0
      %p237 = por %p235, %p236
      %p238 = scmp.ne.s32.totalorder %s227, %s230
      %p239 = scmp.eq.s32.totalorder %s28, 3
      %p240 = por %p238, %p239
      %p241 = scmp.ne.s32.totalorder %s230, %s231
      %p242 = scmp.eq.s32.totalorder %s28, 0
      %p243 = por %p241, %p242
      %p244 = scmp.ne.s32.totalorder %s230, %s231
      %p245 = scmp.eq.s32.totalorder %s29, 3
      %p246 = por %p244, %p245
      %p248 = scmp.ne.s32.totalorder %s231, %s247
      %p249 = scmp.eq.s32.totalorder %s29, 0
      %p250 = por %p248, %p249
      %s251 = ssub.s32 %s31, %s38
      %p252 = scmp.eq.s32.totalorder %s251, 0
      %s254 = sadd.s32 %s253, 1
      %s255 = scalar_select %p252, %s253, %s254
      %p258 = pneg %p252
      %p259 = scmp.eq.s32.totalorder %s23, 3
      %p260 = por %p258, %p259
      %p261 = scmp.ne.s32.totalorder %s253, %s256
      %p262 = scmp.eq.s32.totalorder %s23, 0
      %p263 = por %p261, %p262
      %p264 = scmp.ne.s32.totalorder %s253, %s256
      %p265 = scmp.eq.s32.totalorder %s28, 3
      %p266 = por %p264, %p265
      %p267 = scmp.ne.s32.totalorder %s256, %s257
      %p268 = scmp.eq.s32.totalorder %s28, 0
      %p269 = por %p267, %p268
      %p270 = scmp.ne.s32.totalorder %s256, %s257
      %p271 = scmp.eq.s32.totalorder %s29, 3
      %p272 = por %p270, %p271
      %p274 = scmp.ne.s32.totalorder %s257, %s273
      %p275 = scmp.eq.s32.totalorder %s29, 0
      %p276 = por %p274, %p275
      %s277 = ssub.s32 %s31, %s38
      %p278 = scmp.eq.s32.totalorder %s277, 0
      %s280 = sadd.s32 %s279, 1
      %s281 = scalar_select %p278, %s279, %s280
      %p284 = pneg %p278
      %p285 = scmp.eq.s32.totalorder %s23, 3
      %p286 = por %p284, %p285
      %p287 = scmp.ne.s32.totalorder %s279, %s282
      %p288 = scmp.eq.s32.totalorder %s23, 0
      %p289 = por %p287, %p288
      %p290 = scmp.ne.s32.totalorder %s279, %s282
      %p291 = scmp.eq.s32.totalorder %s28, 3
      %p292 = por %p290, %p291
      %p293 = scmp.ne.s32.totalorder %s282, %s283
      %p294 = scmp.eq.s32.totalorder %s28, 0
      %p295 = por %p293, %p294
      %p296 = scmp.ne.s32.totalorder %s282, %s283
      %p297 = scmp.eq.s32.totalorder %s29, 3
      %p298 = por %p296, %p297
      %p300 = scmp.ne.s32.totalorder %s283, %s299
      %p301 = scmp.eq.s32.totalorder %s29, 0
      %p302 = por %p300, %p301
      %s303 = ssub.s32 %s31, %s38
      %p304 = scmp.eq.s32.totalorder %s303, 0
      %s306 = sadd.s32 %s305, 1
      %s307 = scalar_select %p304, %s305, %s306
      %p310 = pneg %p304
      %p311 = scmp.eq.s32.totalorder %s23, 3
      %p312 = por %p310, %p311
      %p313 = scmp.ne.s32.totalorder %s305, %s308
      %p314 = scmp.eq.s32.totalorder %s23, 0
      %p315 = por %p313, %p314
      %p316 = scmp.ne.s32.totalorder %s305, %s308
      %p317 = scmp.eq.s32.totalorder %s28, 3
      %p318 = por %p316, %p317
      %p319 = scmp.ne.s32.totalorder %s308, %s309
      %p320 = scmp.eq.s32.totalorder %s28, 0
      %p321 = por %p319, %p320
      %p322 = scmp.ne.s32.totalorder %s308, %s309
      %p323 = scmp.eq.s32.totalorder %s29, 3
      %p324 = por %p322, %p323
      %p326 = scmp.ne.s32.totalorder %s309, %s325
      %p327 = scmp.eq.s32.totalorder %s29, 0
      %p328 = por %p326, %p327
      %s329 = ssub.s32 %s30, %s42
      %p330 = scmp.eq.s32.totalorder %s329, 0
      %s332 = sadd.s32 %s331, 1
      %s333 = scalar_select %p330, %s331, %s332
      %p336 = pneg %p330
      %p337 = scmp.eq.s32.totalorder %s23, 3
      %p338 = por %p336, %p337
      %p339 = scmp.ne.s32.totalorder %s331, %s334
      %p340 = scmp.eq.s32.totalorder %s23, 0
      %p341 = por %p339, %p340
      %p342 = scmp.ne.s32.totalorder %s331, %s334
      %p343 = scmp.eq.s32.totalorder %s28, 3
      %p344 = por %p342, %p343
      %p345 = scmp.ne.s32.totalorder %s334, %s335
      %p346 = scmp.eq.s32.totalorder %s28, 0
      %p347 = por %p345, %p346
      %p348 = scmp.ne.s32.totalorder %s334, %s335
      %p349 = scmp.eq.s32.totalorder %s29, 3
      %p350 = por %p348, %p349
      %p352 = scmp.ne.s32.totalorder %s335, %s351
      %p353 = scmp.eq.s32.totalorder %s29, 0
      %p354 = por %p352, %p353
      %p355 = scmp.le.s32.totalorder 1, %s23
      %p356 = scmp.lt.s32.totalorder %s23, 5
      %p357 = pnand %p355, %p356
      %p358 = pneg %p357
      // Predicated region
      $region9: #{tpu_custom_call.1} parent=5 // pred_check
        _
      $region10: #{tpu_custom_call.1} parent=5 // pred_check_branch
        %360 = sbr.rel (%p357) target = $region12
      $region11: #{tpu_custom_call.1} parent=5 // pred_region
        %s361 = ssub.s32 %s23, 1
      $region12: #{tpu_custom_call.1} parent=5 // pred_fallthru
        _
      %p362 = scmp.lt.s32.totalorder %s23, 4
      // Predicated region
      $region13: #{tpu_custom_call.1} parent=5 // pred_check
        %p363 = pneg %p362
      $region14: #{tpu_custom_call.1} parent=5 // pred_check_branch
        %365 = sbr.rel (%p363) target = $region16
      $region15: #{tpu_custom_call.1} parent=5 // pred_region
        // Predicated region
        $region17: #{tpu_custom_call.1} parent=15 // pred_check
          %p366 = pneg %p55
        $region18: #{tpu_custom_call.1} parent=15 // pred_check_branch
          %368 = sbr.rel (%p366) target = $region20
        $region19: #{tpu_custom_call.1} parent=15 // pred_region
          %s369 = sand.u32 %s45, 1
          %s370 = scalar_lea.sflag [#allocation4], %s369
          %s371 = sand.u32 %s45, 1
          %s372 = smul.addr %s371, 8
          %s373 = scalar_lea.vmem [#allocation3], %s372
          %s375 = ssub.s32 128, 128
          %376 = vsyncadd %s370, %s375
          %s377 = smul.addr %s30, 128
          %s378 = scalar_lea.hbm %s0, %s377
          %s380 = sshll.u32 %s373, 4
          %s381 = int_to_ptr.vmem [resolvable:$true] %s380
          %383 = dma.hbm_to_vmem [thread:$0]  %s378, 128, %s381, %s370
        $region20: #{tpu_custom_call.1} parent=15 // pred_fallthru
          _
        // Predicated region
        $region21: #{tpu_custom_call.1} parent=15 // pred_check
          %p384 = pneg %p81
        $region22: #{tpu_custom_call.1} parent=15 // pred_check_branch
          %386 = sbr.rel (%p384) target = $region24
        $region23: #{tpu_custom_call.1} parent=15 // pred_region
          %p387 = scmp.lt.s32.totalorder %s31, 1
          %s388 = scalar_select %p387, %s31, 1
          %s389 = scalar_lea.vmem %s1, %s388
        $region24: #{tpu_custom_call.1} parent=15 // pred_fallthru
          _
        // Predicated region
        $region25: #{tpu_custom_call.1} parent=15 // pred_check
          %p390 = pneg %p107
        $region26: #{tpu_custom_call.1} parent=15 // pred_check_branch
          %392 = sbr.rel (%p390) target = $region28
        $region27: #{tpu_custom_call.1} parent=15 // pred_region
          %p393 = scmp.lt.s32.totalorder %s31, 1
          %s394 = scalar_select %p393, %s31, 1
          %s395 = scalar_lea.vmem %s2, %s394
        $region28: #{tpu_custom_call.1} parent=15 // pred_fallthru
          _
        // Predicated region
        $region29: #{tpu_custom_call.1} parent=15 // pred_check
          %p396 = pneg %p133
        $region30: #{tpu_custom_call.1} parent=15 // pred_check_branch
          %398 = sbr.rel (%p396) target = $region32
        $region31: #{tpu_custom_call.1} parent=15 // pred_region
          %p399 = scmp.lt.s32.totalorder %s31, 1
          %s400 = scalar_select %p399, %s31, 1
          %s401 = smul.addr %s400, 8
          %s402 = smul.addr %s401, 4
          %s403 = scalar_lea.vmem %s3, %s402
        $region32: #{tpu_custom_call.1} parent=15 // pred_fallthru
          _
        // Predicated region
        $region33: #{tpu_custom_call.1} parent=15 // pred_check
          %p404 = pneg %p159
        $region34: #{tpu_custom_call.1} parent=15 // pred_check_branch
          %406 = sbr.rel (%p404) target = $region36
        $region35: #{tpu_custom_call.1} parent=15 // pred_region
          %p407 = scmp.lt.s32.totalorder %s31, 1
          %s408 = scalar_select %p407, %s31, 1
          %s409 = smul.addr %s408, 8
          %s410 = smul.addr %s409, 4
          %s411 = scalar_lea.vmem %s4, %s410
        $region36: #{tpu_custom_call.1} parent=15 // pred_fallthru
          _
        // Predicated region
        $region37: #{tpu_custom_call.1} parent=15 // pred_check
          %p412 = pneg %p185
        $region38: #{tpu_custom_call.1} parent=15 // pred_check_branch
          %414 = sbr.rel (%p412) target = $region40
        $region39: #{tpu_custom_call.1} parent=15 // pred_region
          %p415 = scmp.lt.s32.totalorder %s31, 1
          %s416 = scalar_select %p415, %s31, 1
          %s417 = scalar_lea.vmem %s5, %s416
        $region40: #{tpu_custom_call.1} parent=15 // pred_fallthru
          _
        // Predicated region
        $region41: #{tpu_custom_call.1} parent=15 // pred_check
          %p418 = pneg %p211
        $region42: #{tpu_custom_call.1} parent=15 // pred_check_branch
          %420 = sbr.rel (%p418) target = $region44
        $region43: #{tpu_custom_call.1} parent=15 // pred_region
          %p421 = scmp.lt.s32.totalorder %s31, 1
          %s422 = scalar_select %p421, %s31, 1
          %s423 = scalar_lea.vmem %s6, %s422
        $region44: #{tpu_custom_call.1} parent=15 // pred_fallthru
          _
        // Predicated region
        $region45: #{tpu_custom_call.1} parent=15 // pred_check
          %p424 = pneg %p237
        $region46: #{tpu_custom_call.1} parent=15 // pred_check_branch
          %426 = sbr.rel (%p424) target = $region48
        $region47: #{tpu_custom_call.1} parent=15 // pred_region
          %p427 = scmp.lt.s32.totalorder %s31, 1
          %s428 = scalar_select %p427, %s31, 1
          %s429 = smul.addr %s428, 4
          %s430 = smul.addr %s429, 4
          %s431 = scalar_lea.vmem %s7, %s430
        $region48: #{tpu_custom_call.1} parent=15 // pred_fallthru
          _
        // Predicated region
        $region49: #{tpu_custom_call.1} parent=15 // pred_check
          %p432 = pneg %p263
        $region50: #{tpu_custom_call.1} parent=15 // pred_check_branch
          %434 = sbr.rel (%p432) target = $region52
        $region51: #{tpu_custom_call.1} parent=15 // pred_region
          %p435 = scmp.lt.s32.totalorder %s31, 1
          %s436 = scalar_select %p435, %s31, 1
          %s437 = scalar_lea.vmem %s8, %s436
        $region52: #{tpu_custom_call.1} parent=15 // pred_fallthru
          _
        // Predicated region
        $region53: #{tpu_custom_call.1} parent=15 // pred_check
          %p438 = pneg %p289
        $region54: #{tpu_custom_call.1} parent=15 // pred_check_branch
          %440 = sbr.rel (%p438) target = $region56
        $region55: #{tpu_custom_call.1} parent=15 // pred_region
          %p441 = scmp.lt.s32.totalorder %s31, 1
          %s442 = scalar_select %p441, %s31, 1
          %s443 = smul.addr %s442, 8
          %s444 = smul.addr %s443, 4
          %s445 = scalar_lea.vmem %s9, %s444
        $region56: #{tpu_custom_call.1} parent=15 // pred_fallthru
          _
        // Predicated region
        $region57: #{tpu_custom_call.1} parent=15 // pred_check
          %p446 = pneg %p315
        $region58: #{tpu_custom_call.1} parent=15 // pred_check_branch
          %448 = sbr.rel (%p446) target = $region60
        $region59: #{tpu_custom_call.1} parent=15 // pred_region
          %p449 = scmp.lt.s32.totalorder %s31, 1
          %s450 = scalar_select %p449, %s31, 1
          %s451 = scalar_lea.vmem %s10, %s450
        $region60: #{tpu_custom_call.1} parent=15 // pred_fallthru
          _
      $region16: #{tpu_custom_call.1} parent=5 // pred_fallthru
        _
      %p452 = scmp.le.s32.totalorder 1, %s23
      %p453 = scmp.lt.s32.totalorder %s23, 5
      %p454 = pnand %p452, %p453
      %p455 = pneg %p454
      // Predicated region
      $region61: #{tpu_custom_call.1} parent=5 // pred_check
        _
      $region62: #{tpu_custom_call.1} parent=5 // pred_check_branch
        %457 = sbr.rel (%p454) target = $region64
      $region63: #{tpu_custom_call.1} parent=5 // pred_region
        %s458 = ssub.s32 %s23, 1
        %s459 = sand.u32 %s48, 1
        %s460 = scalar_lea.sflag [#allocation4], %s459
        %s461 = sand.u32 %s48, 1
        %s462 = smul.addr %s461, 8
        %s463 = scalar_lea.vmem [#allocation3], %s462
        // Predicated region
        $region65: #{tpu_custom_call.1} parent=63 // pred_check
          %p464 = pneg %p61
        $region66: #{tpu_custom_call.1} parent=63 // pred_check_branch
          %466 = sbr.rel (%p464) target = $region68
        $region67: #{tpu_custom_call.1} parent=63 // pred_region
          %467 = dma.done %s460, 128
        $region68: #{tpu_custom_call.1} parent=63 // pred_fallthru
          _
        %s468 = sand.u32 %s48, 1
        %s469 = scalar_lea.sflag [#allocation4], %s468
        %s470 = sand.u32 %s48, 1
        %s471 = smul.addr %s470, 8
        %s472 = scalar_lea.vmem [#allocation3], %s471
        %p473 = pneg %p61
        %p474 = pneg %p58
        %p475 = scmp.lt.s32.totalorder %s33, 1
        %s476 = scalar_select %p475, %s33, 1
        %s477 = scalar_lea.vmem %s1, %s476
        %p478 = pneg %p87
        %p479 = pneg %p84
        %p480 = scmp.lt.s32.totalorder %s33, 1
        %s481 = scalar_select %p480, %s33, 1
        %s482 = scalar_lea.vmem %s2, %s481
        %p483 = pneg %p113
        %p484 = pneg %p110
        %p485 = scmp.lt.s32.totalorder %s33, 1
        %s486 = scalar_select %p485, %s33, 1
        %s487 = smul.addr %s486, 8
        %s488 = smul.addr %s487, 4
        %s489 = scalar_lea.vmem %s3, %s488
        %p490 = pneg %p139
        %p491 = pneg %p136
        %p492 = scmp.lt.s32.totalorder %s33, 1
        %s493 = scalar_select %p492, %s33, 1
        %s494 = smul.addr %s493, 8
        %s495 = smul.addr %s494, 4
        %s496 = scalar_lea.vmem %s4, %s495
        %p497 = pneg %p165
        %p498 = pneg %p162
        %p499 = scmp.lt.s32.totalorder %s33, 1
        %s500 = scalar_select %p499, %s33, 1
        %s501 = scalar_lea.vmem %s5, %s500
        %p502 = pneg %p191
        %p503 = pneg %p188
        %p504 = scmp.lt.s32.totalorder %s33, 1
        %s505 = scalar_select %p504, %s33, 1
        %s506 = scalar_lea.vmem %s6, %s505
        %p507 = pneg %p217
        %p508 = pneg %p214
        %p509 = scmp.lt.s32.totalorder %s33, 1
        %s510 = scalar_select %p509, %s33, 1
        %s511 = smul.addr %s510, 4
        %s512 = smul.addr %s511, 4
        %s513 = scalar_lea.vmem %s7, %s512
        %p514 = pneg %p243
        %p515 = pneg %p240
        %p516 = scmp.lt.s32.totalorder %s33, 1
        %s517 = scalar_select %p516, %s33, 1
        %s518 = scalar_lea.vmem %s8, %s517
        %p519 = pneg %p269
        %p520 = pneg %p266
        %p521 = scmp.lt.s32.totalorder %s33, 1
        %s522 = scalar_select %p521, %s33, 1
        %s523 = smul.addr %s522, 8
        %s524 = smul.addr %s523, 4
        %s525 = scalar_lea.vmem %s9, %s524
        %p526 = pneg %p295
        %p527 = pneg %p292
        %p528 = scmp.lt.s32.totalorder %s33, 1
        %s529 = scalar_select %p528, %s33, 1
        %s530 = scalar_lea.vmem %s10, %s529
        %p531 = pneg %p321
        %p532 = pneg %p318
        %p533 = pneg %p347
        %p534 = pneg %p344
        %s535 = sand.u32 %s334, 1
        %s536 = scalar_lea.sflag [#allocation5], %s535
        %s537 = sand.u32 %s334, 1
        %s538 = smul.addr %s537, 8
        %s539 = scalar_lea.vmem [#allocation6], %s538
        %p540 = scmp.lt.s32.totalorder %s33, 1
        %s541 = scalar_select %p540, %s33, 1
        %s542 = scalar_lea.vmem %s1, %s541
        %p543 = scmp.lt.s32.totalorder %s33, 1
        %s544 = scalar_select %p543, %s33, 1
        %s545 = scalar_lea.vmem %s2, %s544
        %p546 = scmp.lt.s32.totalorder %s33, 1
        %s547 = scalar_select %p546, %s33, 1
        %s548 = smul.addr %s547, 8
        %s549 = smul.addr %s548, 4
        %s550 = scalar_lea.vmem %s3, %s549
        %p551 = scmp.lt.s32.totalorder %s33, 1
        %s552 = scalar_select %p551, %s33, 1
        %s553 = smul.addr %s552, 8
        %s554 = smul.addr %s553, 4
        %s555 = scalar_lea.vmem %s4, %s554
        %p556 = scmp.lt.s32.totalorder %s33, 1
        %s557 = scalar_select %p556, %s33, 1
        %s558 = scalar_lea.vmem %s5, %s557
        %p559 = scmp.lt.s32.totalorder %s33, 1
        %s560 = scalar_select %p559, %s33, 1
        %s561 = scalar_lea.vmem %s6, %s560
        %p562 = scmp.lt.s32.totalorder %s33, 1
        %s563 = scalar_select %p562, %s33, 1
        %s564 = smul.addr %s563, 4
        %s565 = smul.addr %s564, 4
        %s566 = scalar_lea.vmem %s7, %s565
        %p567 = scmp.lt.s32.totalorder %s33, 1
        %s568 = scalar_select %p567, %s33, 1
        %s569 = scalar_lea.vmem %s8, %s568
        %p570 = scmp.lt.s32.totalorder %s33, 1
        %s571 = scalar_select %p570, %s33, 1
        %s572 = smul.addr %s571, 8
        %s573 = smul.addr %s572, 4
        %s574 = scalar_lea.vmem %s9, %s573
        %p575 = scmp.lt.s32.totalorder %s33, 1
        %s576 = scalar_select %p575, %s33, 1
        %s577 = scalar_lea.vmem %s10, %s576
        %p579 = scmp.eq.s32.totalorder %s33, 0
        // Predicated region
        $region69: #{tpu_custom_call.1} parent=63 // pred_check
          %p580 = pneg %p579
        $region70: #{tpu_custom_call.1} parent=63 // pred_check_branch
          %582 = sbr.rel (%p580) target = $region72
        $region71: #{tpu_custom_call.1} parent=63 // pred_region
          %v583 = vld [vmem:[%s463] sm:$0xff]
          %vm584 = vcmask 261120
          %585 = vst.msk [vmem:[#allocation2] sm:$0xff] %vm584, %v583
        $region72: #{tpu_custom_call.1} parent=63 // pred_fallthru
          _
        %v586 = vld [vmem:[#allocation2] sm:$0xff]
        %v587 = vld [vmem:[%s542] sm:$0x1]
        %v588 = vld [vmem:[%s545] sm:$0x1]
        %vm589 = vcmask 261120
        %v590 = vsel %vm589, %v586, 0.0
        %591 = vadd.xlane.f32.xlu0 %v590
        %v592 = vpop.xlane.xlu0 %591
        %v593 = vrcp.pop 32.0
        %v594 = vmul.f32 %v592, %v593
        %v595 = vsub.f32 %v586, %v594
        %v596 = vmul.f32 %v595, %v595
        %v597 = vsel %vm589, %v596, 0.0
        %598 = vadd.xlane.f32.xlu0 %v597
        %v599 = vpop.xlane.xlu0 %598
        %v600 = vmul.f32 %v599, %v593
        %v601 = vadd.f32 %v600, 1e-05
        %v602 = vrsqrt.pop %v601
        %v603 = vmul.f32 %v595, %v602
        %v605 = vlaneseq
        %v606 = vshrl.u32 %v605, 7
        %v607 = vsub.s32 0, %v606
        %v608 = vrot.slane %v587, %v607
        %v610 = vmul.f32 %v603, %v608
        %v612 = vlaneseq
        %v613 = vshrl.u32 %v612, 7
        %v614 = vsub.s32 0, %v613
        %v615 = vrot.slane %v588, %v614
        %v617 = vadd.f32 %v610, %v615
        %v618 = vpack.c.bf16 %v617, %v617
        %v619 = vld [vmem:[%s550] sm:$0xff]
        %v620 = vld [vmem:[%s550 + $0x8] sm:$0xff]
        %v621 = vld [vmem:[%s550 + $0x10] sm:$0xff]
        %v622 = vld [vmem:[%s550 + $0x18] sm:$0xff]
        %v627 = vunpack.c.l.b16 %v619
        %v628 = vunpack.c.h.b16 %v619
        %v629 = vunpack.c.l.b16 %v620
        %v630 = vunpack.c.h.b16 %v620
        %v631 = vunpack.c.l.b16 %v621
        %v632 = vunpack.c.h.b16 %v621
        %v633 = vunpack.c.l.b16 %v622
        %v634 = vunpack.c.h.b16 %v622
        %v635 = vpack.c.b16 %v629, %v627
        %v636 = vpack.c.b16 %v630, %v628
        %v637 = vpack.c.b16 %v633, %v631
        %v638 = vpack.c.b16 %v634, %v632
        %v644 = vsel %vm589, %v618, 0
        %646 = vmatprep.subr.bf16.mxu0 0
        %647 = vmatpush1.bf16.msra.mxu0 0
        %648 = vmatprep.subr.bf16.mxu0 0
        %649 = vmatpush1.bf16.msra.mxu0 0
        %650 = vmatprep.subr.bf16.mxu0 0
        %651 = vmatpush1.bf16.msra.mxu0 0
        %652 = vmatprep.subr.bf16.mxu0 0
        %653 = vmatpush1.bf16.msra.mxu0 0
        %654 = vmatprep.subr.bf16.mxu0 0
        %655 = vmatpush1.bf16.msra.mxu0 0
        %656 = vmatprep.subr.bf16.mxu0 0
        %657 = vmatpush1.bf16.msra.mxu0 0
        %658 = vmatprep.subr.bf16.mxu0 %v638
        %659 = vmatpush1.bf16.msra.mxu0 %v637
        %660 = vmatprep.subr.bf16.mxu0 %v636
        %661 = vmatpush1.bf16.msra.mxu0 %v635
        %662 = vmatprep.subr.bf16.mxu0 0
        %663 = vmatpush2.bf16.msra.mxu0 0
        %664 = vmatprep.subr.bf16.mxu0 0
        %665 = vmatpush2.bf16.msra.mxu0 0
        %666 = vmatprep.subr.bf16.mxu0 0
        %667 = vmatpush2.bf16.msra.mxu0 0
        %668 = vmatprep.subr.bf16.mxu0 0
        %669 = vmatpush2.bf16.msra.mxu0 0
        %670 = vmatprep.subr.bf16.mxu0 0
        %671 = vmatpush2.bf16.msra.mxu0 0
        %672 = vmatprep.subr.bf16.mxu0 0
        %673 = vmatpush2.bf16.msra.mxu0 0
        %674 = vmatprep.subr.bf16.mxu0 0
        %675 = vmatpush2.bf16.msra.mxu0 0
        %676 = vmatprep.subr.bf16.mxu0 0
        %677 = vmatpush2.bf16.msra.mxu0 0
        %678 = vmatprep.mubr.bf16.mxu0 0
        %679 = vmatmul.mubr.bf16.gmra.mxu0 %v644
        %v680 = vpop.f32.mrf.mxu0
        %v681 = vadd.f32 0.0, %v680
        %v682 = vpop.f32.mrf.mxu0
        %v683 = vadd.f32 0.0, %v682
        %v684 = vpop.f32.mrf.mxu0
        %v685 = vpop.f32.mrf.mxu0
        %686 = vdwg.mxu0
        %v687 = vpack.c.bf16 %v681, %v681
        %689 = vrot.lane.b32.xlu0 %v687, 64
        %v690 = vpop.permute.xlu0 %689
        %vm691 = vcmask 130048
        %v693 = vsel %vm691, %v687, 0
        %v696 = vsel %vm691, %v690, 0
        %698 = vmatprep.subr.bf16.mxu0 0
        %699 = vmatpush1.bf16.xpose.msra.mxu0 0
        %700 = vmatprep.subr.bf16.mxu0 0
        %701 = vmatpush1.bf16.xpose.msra.mxu0 0
        %702 = vmatprep.subr.bf16.mxu0 0
        %703 = vmatpush1.bf16.xpose.msra.mxu0 0
        %704 = vmatprep.subr.bf16.mxu0 0
        %705 = vmatpush1.bf16.xpose.msra.mxu0 0
        %706 = vmatprep.subr.bf16.mxu0 0
        %707 = vmatpush1.bf16.xpose.msra.mxu0 0
        %708 = vmatprep.subr.bf16.mxu0 0
        %709 = vmatpush1.bf16.xpose.msra.mxu0 0
        %710 = vmatprep.subr.bf16.mxu0 0
        %711 = vmatpush1.bf16.xpose.msra.mxu0 0
        %712 = vmatprep.subr.bf16.mxu0 0
        %713 = vmatpush1.bf16.xpose.msra.mxu0 %v696
        %714 = vmatprep.subr.bf16.mxu0 0
        %715 = vmatpush2.bf16.xpose.msra.mxu0 0
        %716 = vmatprep.subr.bf16.mxu0 0
        %717 = vmatpush2.bf16.xpose.msra.mxu0 0
        %718 = vmatprep.subr.bf16.mxu0 0
        %719 = vmatpush2.bf16.xpose.msra.mxu0 0
        %720 = vmatprep.subr.bf16.mxu0 0
        %721 = vmatpush2.bf16.xpose.msra.mxu0 0
        %722 = vmatprep.subr.bf16.mxu0 0
        %723 = vmatpush2.bf16.xpose.msra.mxu0 0
        %724 = vmatprep.subr.bf16.mxu0 0
        %725 = vmatpush2.bf16.xpose.msra.mxu0 0
        %726 = vmatprep.subr.bf16.mxu0 0
        %727 = vmatpush2.bf16.xpose.msra.mxu0 0
        %728 = vmatprep.subr.bf16.mxu0 0
        %729 = vmatpush2.bf16.xpose.msra.mxu0 0
        %730 = vmatprep.mubr.bf16.mxu0 0
        %731 = vmatmul.mubr.bf16.gmra.mxu0 %v693
        %v732 = vpop.f32.mrf.mxu0
        %v733 = vadd.f32 0.0, %v732
        %v734 = vpop.f32.mrf.mxu0
        %v735 = vpop.f32.mrf.mxu0
        %v736 = vpop.f32.mrf.mxu0
        %737 = vdwg.mxu0
        %v738 = vmul.f32 %v733, 0.25
        %vm739 = vcmask 64512
        %v740 = vsel %vm739, %v738, -inf
        %741 = vmax.xlane.f32.xlu0 %v740
        %v742 = vpop.xlane.xlu0 %741
        %v743 = vsub.f32 %v738, %v742
        %v744 = vmul.f32 %v743, 1.442695
        %v745 = vpow.pop %v744
        %v746 = vsel %vm739, %v745, 0.0
        %747 = vadd.xlane.f32.xlu0 %v746
        %v748 = vpop.xlane.xlu0 %747
        %v749 = vrcp.pop %v748
        %v750 = vmul.f32 %v745, %v749
        %v751 = vpack.c.bf16 %v750, %v750
        %v752 = vpack.c.bf16 %v683, %v683
        %v754 = vsel %vm739, %v751, 0
        %vm756 = vcmask 1043456
        %v758 = vsel %vm756, %v752, 0
        %760 = vmatprep.subr.bf16.mxu0 0
        %761 = vmatpush1.bf16.msra.mxu0 0
        %762 = vmatprep.subr.bf16.mxu0 0
        %763 = vmatpush1.bf16.msra.mxu0 0
        %764 = vmatprep.subr.bf16.mxu0 0
        %765 = vmatpush1.bf16.msra.mxu0 0
        %766 = vmatprep.subr.bf16.mxu0 0
        %767 = vmatpush1.bf16.msra.mxu0 0
        %768 = vmatprep.subr.bf16.mxu0 0
        %769 = vmatpush1.bf16.msra.mxu0 0
        %770 = vmatprep.subr.bf16.mxu0 0
        %771 = vmatpush1.bf16.msra.mxu0 0
        %772 = vmatprep.subr.bf16.mxu0 0
        %773 = vmatpush1.bf16.msra.mxu0 0
        %774 = vmatprep.subr.bf16.mxu0 0
        %775 = vmatpush1.bf16.msra.mxu0 %v758
        %776 = vmatprep.subr.bf16.mxu0 0
        %777 = vmatpush2.bf16.msra.mxu0 0
        %778 = vmatprep.subr.bf16.mxu0 0
        %779 = vmatpush2.bf16.msra.mxu0 0
        %780 = vmatprep.subr.bf16.mxu0 0
        %781 = vmatpush2.bf16.msra.mxu0 0
        %782 = vmatprep.subr.bf16.mxu0 0
        %783 = vmatpush2.bf16.msra.mxu0 0
        %784 = vmatprep.subr.bf16.mxu0 0
        %785 = vmatpush2.bf16.msra.mxu0 0
        %786 = vmatprep.subr.bf16.mxu0 0
        %787 = vmatpush2.bf16.msra.mxu0 0
        %788 = vmatprep.subr.bf16.mxu0 0
        %789 = vmatpush2.bf16.msra.mxu0 0
        %790 = vmatprep.subr.bf16.mxu0 0
        %791 = vmatpush2.bf16.msra.mxu0 0
        %792 = vmatprep.mubr.bf16.mxu0 0
        %793 = vmatmul.mubr.bf16.gmra.mxu0 %v754
        %v794 = vpop.f32.mrf.mxu0
        %v795 = vadd.f32 0.0, %v794
        %v796 = vpop.f32.mrf.mxu0
        %v797 = vpop.f32.mrf.mxu0
        %v798 = vpop.f32.mrf.mxu0
        %799 = vdwg.mxu0
        %800 = vrot.lane.b32.xlu0 %v687, 112
        %v801 = vpop.permute.xlu0 %800
        %802 = vrot.lane.b32.xlu0 %v687, 48
        %v803 = vpop.permute.xlu0 %802
        %v805 = vsel %vm691, %v801, 0
        %v808 = vsel %vm691, %v803, 0
        %810 = vmatprep.subr.bf16.mxu0 0
        %811 = vmatpush1.bf16.xpose.msra.mxu0 0
        %812 = vmatprep.subr.bf16.mxu0 0
        %813 = vmatpush1.bf16.xpose.msra.mxu0 0
        %814 = vmatprep.subr.bf16.mxu0 0
        %815 = vmatpush1.bf16.xpose.msra.mxu0 0
        %816 = vmatprep.subr.bf16.mxu0 0
        %817 = vmatpush1.bf16.xpose.msra.mxu0 0
        %818 = vmatprep.subr.bf16.mxu0 0
        %819 = vmatpush1.bf16.xpose.msra.mxu0 0
        %820 = vmatprep.subr.bf16.mxu0 0
        %821 = vmatpush1.bf16.xpose.msra.mxu0 0
        %822 = vmatprep.subr.bf16.mxu0 0
        %823 = vmatpush1.bf16.xpose.msra.mxu0 0
        %824 = vmatprep.subr.bf16.mxu0 0
        %825 = vmatpush1.bf16.xpose.msra.mxu0 %v808
        %826 = vmatprep.subr.bf16.mxu0 0
        %827 = vmatpush2.bf16.xpose.msra.mxu0 0
        %828 = vmatprep.subr.bf16.mxu0 0
        %829 = vmatpush2.bf16.xpose.msra.mxu0 0
        %830 = vmatprep.subr.bf16.mxu0 0
        %831 = vmatpush2.bf16.xpose.msra.mxu0 0
        %832 = vmatprep.subr.bf16.mxu0 0
        %833 = vmatpush2.bf16.xpose.msra.mxu0 0
        %834 = vmatprep.subr.bf16.mxu0 0
        %835 = vmatpush2.bf16.xpose.msra.mxu0 0
        %836 = vmatprep.subr.bf16.mxu0 0
        %837 = vmatpush2.bf16.xpose.msra.mxu0 0
        %838 = vmatprep.subr.bf16.mxu0 0
        %839 = vmatpush2.bf16.xpose.msra.mxu0 0
        %840 = vmatprep.subr.bf16.mxu0 0
        %841 = vmatpush2.bf16.xpose.msra.mxu0 0
        %842 = vmatprep.mubr.bf16.mxu0 0
        %843 = vmatmul.mubr.bf16.gmra.mxu0 %v805
        %v844 = vpop.f32.mrf.mxu0
        %v845 = vadd.f32 0.0, %v844
        %v846 = vpop.f32.mrf.mxu0
        %v847 = vpop.f32.mrf.mxu0
        %v848 = vpop.f32.mrf.mxu0
        %849 = vdwg.mxu0
        %v850 = vmul.f32 %v845, 0.25
        %v851 = vsel %vm739, %v850, -inf
        %852 = vmax.xlane.f32.xlu0 %v851
        %v853 = vpop.xlane.xlu0 %852
        %v854 = vsub.f32 %v850, %v853
        %v855 = vmul.f32 %v854, 1.442695
        %v856 = vpow.pop %v855
        %v857 = vsel %vm739, %v856, 0.0
        %858 = vadd.xlane.f32.xlu0 %v857
        %v859 = vpop.xlane.xlu0 %858
        %v860 = vrcp.pop %v859
        %v861 = vmul.f32 %v856, %v860
        %v862 = vpack.c.bf16 %v861, %v861
        %864 = vrot.lane.b32.xlu0 %v752, 112
        %v865 = vpop.permute.xlu0 %864
        %v867 = vsel %vm739, %v862, 0
        %v870 = vsel %vm756, %v865, 0
        %872 = vmatprep.subr.bf16.mxu0 0
        %873 = vmatpush1.bf16.msra.mxu0 0
        %874 = vmatprep.subr.bf16.mxu0 0
        %875 = vmatpush1.bf16.msra.mxu0 0
        %876 = vmatprep.subr.bf16.mxu0 0
        %877 = vmatpush1.bf16.msra.mxu0 0
        %878 = vmatprep.subr.bf16.mxu0 0
        %879 = vmatpush1.bf16.msra.mxu0 0
        %880 = vmatprep.subr.bf16.mxu0 0
        %881 = vmatpush1.bf16.msra.mxu0 0
        %882 = vmatprep.subr.bf16.mxu0 0
        %883 = vmatpush1.bf16.msra.mxu0 0
        %884 = vmatprep.subr.bf16.mxu0 0
        %885 = vmatpush1.bf16.msra.mxu0 0
        %886 = vmatprep.subr.bf16.mxu0 0
        %887 = vmatpush1.bf16.msra.mxu0 %v870
        %888 = vmatprep.subr.bf16.mxu0 0
        %889 = vmatpush2.bf16.msra.mxu0 0
        %890 = vmatprep.subr.bf16.mxu0 0
        %891 = vmatpush2.bf16.msra.mxu0 0
        %892 = vmatprep.subr.bf16.mxu0 0
        %893 = vmatpush2.bf16.msra.mxu0 0
        %894 = vmatprep.subr.bf16.mxu0 0
        %895 = vmatpush2.bf16.msra.mxu0 0
        %896 = vmatprep.subr.bf16.mxu0 0
        %897 = vmatpush2.bf16.msra.mxu0 0
        %898 = vmatprep.subr.bf16.mxu0 0
        %899 = vmatpush2.bf16.msra.mxu0 0
        %900 = vmatprep.subr.bf16.mxu0 0
        %901 = vmatpush2.bf16.msra.mxu0 0
        %902 = vmatprep.subr.bf16.mxu0 0
        %903 = vmatpush2.bf16.msra.mxu0 0
        %904 = vmatprep.mubr.bf16.mxu0 0
        %905 = vmatmul.mubr.bf16.gmra.mxu0 %v867
        %v906 = vpop.f32.mrf.mxu0
        %v907 = vadd.f32 0.0, %v906
        %v908 = vpop.f32.mrf.mxu0
        %v909 = vpop.f32.mrf.mxu0
        %v910 = vpop.f32.mrf.mxu0
        %911 = vdwg.mxu0
        %912 = vrot.lane.b32.xlu0 %v687, 96
        %v913 = vpop.permute.xlu0 %912
        %914 = vrot.lane.b32.xlu0 %v687, 32
        %v915 = vpop.permute.xlu0 %914
        %v917 = vsel %vm691, %v913, 0
        %v920 = vsel %vm691, %v915, 0
        %922 = vmatprep.subr.bf16.mxu0 0
        %923 = vmatpush1.bf16.xpose.msra.mxu0 0
        %924 = vmatprep.subr.bf16.mxu0 0
        %925 = vmatpush1.bf16.xpose.msra.mxu0 0
        %926 = vmatprep.subr.bf16.mxu0 0
        %927 = vmatpush1.bf16.xpose.msra.mxu0 0
        %928 = vmatprep.subr.bf16.mxu0 0
        %929 = vmatpush1.bf16.xpose.msra.mxu0 0
        %930 = vmatprep.subr.bf16.mxu0 0
        %931 = vmatpush1.bf16.xpose.msra.mxu0 0
        %932 = vmatprep.subr.bf16.mxu0 0
        %933 = vmatpush1.bf16.xpose.msra.mxu0 0
        %934 = vmatprep.subr.bf16.mxu0 0
        %935 = vmatpush1.bf16.xpose.msra.mxu0 0
        %936 = vmatprep.subr.bf16.mxu0 0
        %937 = vmatpush1.bf16.xpose.msra.mxu0 %v920
        %938 = vmatprep.subr.bf16.mxu0 0
        %939 = vmatpush2.bf16.xpose.msra.mxu0 0
        %940 = vmatprep.subr.bf16.mxu0 0
        %941 = vmatpush2.bf16.xpose.msra.mxu0 0
        %942 = vmatprep.subr.bf16.mxu0 0
        %943 = vmatpush2.bf16.xpose.msra.mxu0 0
        %944 = vmatprep.subr.bf16.mxu0 0
        %945 = vmatpush2.bf16.xpose.msra.mxu0 0
        %946 = vmatprep.subr.bf16.mxu0 0
        %947 = vmatpush2.bf16.xpose.msra.mxu0 0
        %948 = vmatprep.subr.bf16.mxu0 0
        %949 = vmatpush2.bf16.xpose.msra.mxu0 0
        %950 = vmatprep.subr.bf16.mxu0 0
        %951 = vmatpush2.bf16.xpose.msra.mxu0 0
        %952 = vmatprep.subr.bf16.mxu0 0
        %953 = vmatpush2.bf16.xpose.msra.mxu0 0
        %954 = vmatprep.mubr.bf16.mxu0 0
        %955 = vmatmul.mubr.bf16.gmra.mxu0 %v917
        %v956 = vpop.f32.mrf.mxu0
        %v957 = vadd.f32 0.0, %v956
        %v958 = vpop.f32.mrf.mxu0
        %v959 = vpop.f32.mrf.mxu0
        %v960 = vpop.f32.mrf.mxu0
        %961 = vdwg.mxu0
        %v962 = vmul.f32 %v957, 0.25
        %v963 = vsel %vm739, %v962, -inf
        %964 = vmax.xlane.f32.xlu0 %v963
        %v965 = vpop.xlane.xlu0 %964
        %v966 = vsub.f32 %v962, %v965
        %v967 = vmul.f32 %v966, 1.442695
        %v968 = vpow.pop %v967
        %v969 = vsel %vm739, %v968, 0.0
        %970 = vadd.xlane.f32.xlu0 %v969
        %v971 = vpop.xlane.xlu0 %970
        %v972 = vrcp.pop %v971
        %v973 = vmul.f32 %v968, %v972
        %v974 = vpack.c.bf16 %v973, %v973
        %975 = vrot.lane.b32.xlu0 %v752, 96
        %v976 = vpop.permute.xlu0 %975
        %v978 = vsel %vm739, %v974, 0
        %v981 = vsel %vm756, %v976, 0
        %983 = vmatprep.subr.bf16.mxu0 0
        %984 = vmatpush1.bf16.msra.mxu0 0
        %985 = vmatprep.subr.bf16.mxu0 0
        %986 = vmatpush1.bf16.msra.mxu0 0
        %987 = vmatprep.subr.bf16.mxu0 0
        %988 = vmatpush1.bf16.msra.mxu0 0
        %989 = vmatprep.subr.bf16.mxu0 0
        %990 = vmatpush1.bf16.msra.mxu0 0
        %991 = vmatprep.subr.bf16.mxu0 0
        %992 = vmatpush1.bf16.msra.mxu0 0
        %993 = vmatprep.subr.bf16.mxu0 0
        %994 = vmatpush1.bf16.msra.mxu0 0
        %995 = vmatprep.subr.bf16.mxu0 0
        %996 = vmatpush1.bf16.msra.mxu0 0
        %997 = vmatprep.subr.bf16.mxu0 0
        %998 = vmatpush1.bf16.msra.mxu0 %v981
        %999 = vmatprep.subr.bf16.mxu0 0
        %1000 = vmatpush2.bf16.msra.mxu0 0
        %1001 = vmatprep.subr.bf16.mxu0 0
        %1002 = vmatpush2.bf16.msra.mxu0 0
        %1003 = vmatprep.subr.bf16.mxu0 0
        %1004 = vmatpush2.bf16.msra.mxu0 0
        %1005 = vmatprep.subr.bf16.mxu0 0
        %1006 = vmatpush2.bf16.msra.mxu0 0
        %1007 = vmatprep.subr.bf16.mxu0 0
        %1008 = vmatpush2.bf16.msra.mxu0 0
        %1009 = vmatprep.subr.bf16.mxu0 0
        %1010 = vmatpush2.bf16.msra.mxu0 0
        %1011 = vmatprep.subr.bf16.mxu0 0
        %1012 = vmatpush2.bf16.msra.mxu0 0
        %1013 = vmatprep.subr.bf16.mxu0 0
        %1014 = vmatpush2.bf16.msra.mxu0 0
        %1015 = vmatprep.mubr.bf16.mxu0 0
        %1016 = vmatmul.mubr.bf16.gmra.mxu0 %v978
        %v1017 = vpop.f32.mrf.mxu0
        %v1018 = vadd.f32 0.0, %v1017
        %v1019 = vpop.f32.mrf.mxu0
        %v1020 = vpop.f32.mrf.mxu0
        %v1021 = vpop.f32.mrf.mxu0
        %1022 = vdwg.mxu0
        %1023 = vrot.lane.b32.xlu0 %v687, 80
        %v1024 = vpop.permute.xlu0 %1023
        %1025 = vrot.lane.b32.xlu0 %v687, 16
        %v1026 = vpop.permute.xlu0 %1025
        %v1028 = vsel %vm691, %v1024, 0
        %v1031 = vsel %vm691, %v1026, 0
        %1033 = vmatprep.subr.bf16.mxu0 0
        %1034 = vmatpush1.bf16.xpose.msra.mxu0 0
        %1035 = vmatprep.subr.bf16.mxu0 0
        %1036 = vmatpush1.bf16.xpose.msra.mxu0 0
        %1037 = vmatprep.subr.bf16.mxu0 0
        %1038 = vmatpush1.bf16.xpose.msra.mxu0 0
        %1039 = vmatprep.subr.bf16.mxu0 0
        %1040 = vmatpush1.bf16.xpose.msra.mxu0 0
        %1041 = vmatprep.subr.bf16.mxu0 0
        %1042 = vmatpush1.bf16.xpose.msra.mxu0 0
        %1043 = vmatprep.subr.bf16.mxu0 0
        %1044 = vmatpush1.bf16.xpose.msra.mxu0 0
        %1045 = vmatprep.subr.bf16.mxu0 0
        %1046 = vmatpush1.bf16.xpose.msra.mxu0 0
        %1047 = vmatprep.subr.bf16.mxu0 0
        %1048 = vmatpush1.bf16.xpose.msra.mxu0 %v1031
        %1049 = vmatprep.subr.bf16.mxu0 0
        %1050 = vmatpush2.bf16.xpose.msra.mxu0 0
        %1051 = vmatprep.subr.bf16.mxu0 0
        %1052 = vmatpush2.bf16.xpose.msra.mxu0 0
        %1053 = vmatprep.subr.bf16.mxu0 0
        %1054 = vmatpush2.bf16.xpose.msra.mxu0 0
        %1055 = vmatprep.subr.bf16.mxu0 0
        %1056 = vmatpush2.bf16.xpose.msra.mxu0 0
        %1057 = vmatprep.subr.bf16.mxu0 0
        %1058 = vmatpush2.bf16.xpose.msra.mxu0 0
        %1059 = vmatprep.subr.bf16.mxu0 0
        %1060 = vmatpush2.bf16.xpose.msra.mxu0 0
        %1061 = vmatprep.subr.bf16.mxu0 0
        %1062 = vmatpush2.bf16.xpose.msra.mxu0 0
        %1063 = vmatprep.subr.bf16.mxu0 0
        %1064 = vmatpush2.bf16.xpose.msra.mxu0 0
        %1065 = vmatprep.mubr.bf16.mxu0 0
        %1066 = vmatmul.mubr.bf16.gmra.mxu0 %v1028
        %v1067 = vpop.f32.mrf.mxu0
        %v1068 = vadd.f32 0.0, %v1067
        %v1069 = vpop.f32.mrf.mxu0
        %v1070 = vpop.f32.mrf.mxu0
        %v1071 = vpop.f32.mrf.mxu0
        %1072 = vdwg.mxu0
        %v1073 = vmul.f32 %v1068, 0.25
        %v1074 = vsel %vm739, %v1073, -inf
        %1075 = vmax.xlane.f32.xlu0 %v1074
        %v1076 = vpop.xlane.xlu0 %1075
        %v1077 = vsub.f32 %v1073, %v1076
        %v1078 = vmul.f32 %v1077, 1.442695
        %v1079 = vpow.pop %v1078
        %v1080 = vsel %vm739, %v1079, 0.0
        %1081 = vadd.xlane.f32.xlu0 %v1080
        %v1082 = vpop.xlane.xlu0 %1081
        %v1083 = vrcp.pop %v1082
        %v1084 = vmul.f32 %v1079, %v1083
        %v1085 = vpack.c.bf16 %v1084, %v1084
        %1086 = vrot.lane.b32.xlu0 %v752, 80
        %v1087 = vpop.permute.xlu0 %1086
        %v1089 = vsel %vm739, %v1085, 0
        %v1092 = vsel %vm756, %v1087, 0
        %1094 = vmatprep.subr.bf16.mxu0 0
        %1095 = vmatpush1.bf16.msra.mxu0 0
        %1096 = vmatprep.subr.bf16.mxu0 0
        %1097 = vmatpush1.bf16.msra.mxu0 0
        %1098 = vmatprep.subr.bf16.mxu0 0
        %1099 = vmatpush1.bf16.msra.mxu0 0
        %1100 = vmatprep.subr.bf16.mxu0 0
        %1101 = vmatpush1.bf16.msra.mxu0 0
        %1102 = vmatprep.subr.bf16.mxu0 0
        %1103 = vmatpush1.bf16.msra.mxu0 0
        %1104 = vmatprep.subr.bf16.mxu0 0
        %1105 = vmatpush1.bf16.msra.mxu0 0
        %1106 = vmatprep.subr.bf16.mxu0 0
        %1107 = vmatpush1.bf16.msra.mxu0 0
        %1108 = vmatprep.subr.bf16.mxu0 0
        %1109 = vmatpush1.bf16.msra.mxu0 %v1092
        %1110 = vmatprep.subr.bf16.mxu0 0
        %1111 = vmatpush2.bf16.msra.mxu0 0
        %1112 = vmatprep.subr.bf16.mxu0 0
        %1113 = vmatpush2.bf16.msra.mxu0 0
        %1114 = vmatprep.subr.bf16.mxu0 0
        %1115 = vmatpush2.bf16.msra.mxu0 0
        %1116 = vmatprep.subr.bf16.mxu0 0
        %1117 = vmatpush2.bf16.msra.mxu0 0
        %1118 = vmatprep.subr.bf16.mxu0 0
        %1119 = vmatpush2.bf16.msra.mxu0 0
        %1120 = vmatprep.subr.bf16.mxu0 0
        %1121 = vmatpush2.bf16.msra.mxu0 0
        %1122 = vmatprep.subr.bf16.mxu0 0
        %1123 = vmatpush2.bf16.msra.mxu0 0
        %1124 = vmatprep.subr.bf16.mxu0 0
        %1125 = vmatpush2.bf16.msra.mxu0 0
        %1126 = vmatprep.mubr.bf16.mxu0 0
        %1127 = vmatmul.mubr.bf16.gmra.mxu0 %v1089
        %v1128 = vpop.f32.mrf.mxu0
        %v1129 = vadd.f32 0.0, %v1128
        %v1130 = vpop.f32.mrf.mxu0
        %v1131 = vpop.f32.mrf.mxu0
        %v1132 = vpop.f32.mrf.mxu0
        %1133 = vdwg.mxu0
        %1135 = vrot.lane.b32.xlu0 %v907, 16
        %v1136 = vpop.permute.xlu0 %1135
        %1139 = vrot.lane.b32.xlu0 %v1018, 32
        %v1140 = vpop.permute.xlu0 %1139
        %1143 = vrot.lane.b32.xlu0 %v1129, 48
        %v1144 = vpop.permute.xlu0 %1143
        %v1146 = vsel %vm691, %v795, %v1136
        %v1147 = vsel %vm589, %v1146, %v1140
        %vm1148 = vcmask 392192
        %v1149 = vsel %vm1148, %v1147, %v1144
        %v1150 = vpack.c.bf16 %v1149, %v1149
        %v1151 = vld [vmem:[%s555] sm:$0xf]
        %v1152 = vld [vmem:[%s555 + $0x4] sm:$0xf]
        %v1153 = vld [vmem:[%s555 + $0x8] sm:$0xf]
        %v1154 = vld [vmem:[%s555 + $0xc] sm:$0xf]
        %v1155 = vld [vmem:[%s555 + $0x10] sm:$0xf]
        %v1156 = vld [vmem:[%s555 + $0x14] sm:$0xf]
        %v1157 = vld [vmem:[%s555 + $0x18] sm:$0xf]
        %v1158 = vld [vmem:[%s555 + $0x1c] sm:$0xf]
        %v1167 = vunpack.c.l.b16 %v1151
        %v1168 = vunpack.c.l.b16 %v1152
        %v1169 = vunpack.c.l.b16 %v1153
        %v1170 = vunpack.c.l.b16 %v1154
        %v1171 = vunpack.c.l.b16 %v1155
        %v1172 = vunpack.c.l.b16 %v1156
        %v1173 = vunpack.c.l.b16 %v1157
        %v1174 = vunpack.c.l.b16 %v1158
        %v1175 = vpack.c.b16 %v1168, %v1167
        %v1176 = vpack.c.b16 %v1170, %v1169
        %v1177 = vpack.c.b16 %v1172, %v1171
        %v1178 = vpack.c.b16 %v1174, %v1173
        %vm1183 = vcmask 523264
        %v1185 = vsel %vm1183, %v1150, 0
        %1187 = vmatprep.subr.bf16.mxu0 0
        %1188 = vmatpush1.bf16.msra.mxu0 0
        %1189 = vmatprep.subr.bf16.mxu0 0
        %1190 = vmatpush1.bf16.msra.mxu0 0
        %1191 = vmatprep.subr.bf16.mxu0 0
        %1192 = vmatpush1.bf16.msra.mxu0 0
        %1193 = vmatprep.subr.bf16.mxu0 0
        %1194 = vmatpush1.bf16.msra.mxu0 0
        %1195 = vmatprep.subr.bf16.mxu0 0
        %1196 = vmatpush1.bf16.msra.mxu0 %v1178
        %1197 = vmatprep.subr.bf16.mxu0 0
        %1198 = vmatpush1.bf16.msra.mxu0 %v1177
        %1199 = vmatprep.subr.bf16.mxu0 0
        %1200 = vmatpush1.bf16.msra.mxu0 %v1176
        %1201 = vmatprep.subr.bf16.mxu0 0
        %1202 = vmatpush1.bf16.msra.mxu0 %v1175
        %1203 = vmatprep.subr.bf16.mxu0 0
        %1204 = vmatpush2.bf16.msra.mxu0 0
        %1205 = vmatprep.subr.bf16.mxu0 0
        %1206 = vmatpush2.bf16.msra.mxu0 0
        %1207 = vmatprep.subr.bf16.mxu0 0
        %1208 = vmatpush2.bf16.msra.mxu0 0
        %1209 = vmatprep.subr.bf16.mxu0 0
        %1210 = vmatpush2.bf16.msra.mxu0 0
        %1211 = vmatprep.subr.bf16.mxu0 0
        %1212 = vmatpush2.bf16.msra.mxu0 0
        %1213 = vmatprep.subr.bf16.mxu0 0
        %1214 = vmatpush2.bf16.msra.mxu0 0
        %1215 = vmatprep.subr.bf16.mxu0 0
        %1216 = vmatpush2.bf16.msra.mxu0 0
        %1217 = vmatprep.subr.bf16.mxu0 0
        %1218 = vmatpush2.bf16.msra.mxu0 0
        %1219 = vmatprep.mubr.bf16.mxu0 0
        %1220 = vmatmul.mubr.bf16.gmra.mxu0 %v1185
        %v1221 = vpop.f32.mrf.mxu0
        %v1222 = vadd.f32 %v586, %v1221
        %v1223 = vpop.f32.mrf.mxu0
        %v1224 = vpop.f32.mrf.mxu0
        %v1225 = vpop.f32.mrf.mxu0
        %1226 = vdwg.mxu0
        %v1227 = vld [vmem:[%s558] sm:$0x1]
        %v1228 = vld [vmem:[%s561] sm:$0x1]
        %v1229 = vld [vmem:[%s569] sm:$0x1]
        %v1230 = vld [vmem:[%s577] sm:$0x1]
        %v1231 = vsel %vm589, %v1222, 0.0
        %1232 = vadd.xlane.f32.xlu0 %v1231
        %v1233 = vpop.xlane.xlu0 %1232
        %v1234 = vmul.f32 %v1233, %v593
        %v1235 = vsub.f32 %v1222, %v1234
        %v1236 = vmul.f32 %v1235, %v1235
        %v1237 = vsel %vm589, %v1236, 0.0
        %1238 = vadd.xlane.f32.xlu0 %v1237
        %v1239 = vpop.xlane.xlu0 %1238
        %v1240 = vmul.f32 %v1239, %v593
        %v1241 = vadd.f32 %v1240, 1e-05
        %v1242 = vrsqrt.pop %v1241
        %v1243 = vmul.f32 %v1235, %v1242
        %v1245 = vlaneseq
        %v1246 = vshrl.u32 %v1245, 7
        %v1247 = vsub.s32 0, %v1246
        %v1248 = vrot.slane %v1227, %v1247
        %v1250 = vmul.f32 %v1243, %v1248
        %v1252 = vlaneseq
        %v1253 = vshrl.u32 %v1252, 7
        %v1254 = vsub.s32 0, %v1253
        %v1255 = vrot.slane %v1228, %v1254
        %v1257 = vadd.f32 %v1250, %v1255
        %v1258 = vpack.c.bf16 %v1257, %v1257
        %v1259 = vld [vmem:[%s566] sm:$0xf]
        %v1260 = vld [vmem:[%s566 + $0x4] sm:$0xf]
        %v1261 = vld [vmem:[%s566 + $0x8] sm:$0xf]
        %v1262 = vld [vmem:[%s566 + $0xc] sm:$0xf]
        %v1264 = vlaneseq
        %v1265 = vshrl.u32 %v1264, 7
        %v1266 = vsub.s32 0, %v1265
        %v1267 = vrot.slane %v1229, %v1266
        %v1273 = vunpack.c.l.b16 %v1259
        %v1274 = vunpack.c.l.b16 %v1260
        %v1275 = vunpack.c.l.b16 %v1261
        %v1276 = vunpack.c.l.b16 %v1262
        %v1277 = vpack.c.b16 %v1274, %v1273
        %v1278 = vpack.c.b16 %v1276, %v1275
        %v1282 = vsel %vm589, %v1258, 0
        %1284 = vmatprep.subr.bf16.mxu0 0
        %1285 = vmatpush1.bf16.msra.mxu0 0
        %1286 = vmatprep.subr.bf16.mxu0 0
        %1287 = vmatpush1.bf16.msra.mxu0 0
        %1288 = vmatprep.subr.bf16.mxu0 0
        %1289 = vmatpush1.bf16.msra.mxu0 0
        %1290 = vmatprep.subr.bf16.mxu0 0
        %1291 = vmatpush1.bf16.msra.mxu0 0
        %1292 = vmatprep.subr.bf16.mxu0 0
        %1293 = vmatpush1.bf16.msra.mxu0 0
        %1294 = vmatprep.subr.bf16.mxu0 0
        %1295 = vmatpush1.bf16.msra.mxu0 0
        %1296 = vmatprep.subr.bf16.mxu0 0
        %1297 = vmatpush1.bf16.msra.mxu0 %v1278
        %1298 = vmatprep.subr.bf16.mxu0 0
        %1299 = vmatpush1.bf16.msra.mxu0 %v1277
        %1300 = vmatprep.subr.bf16.mxu0 0
        %1301 = vmatpush2.bf16.msra.mxu0 0
        %1302 = vmatprep.subr.bf16.mxu0 0
        %1303 = vmatpush2.bf16.msra.mxu0 0
        %1304 = vmatprep.subr.bf16.mxu0 0
        %1305 = vmatpush2.bf16.msra.mxu0 0
        %1306 = vmatprep.subr.bf16.mxu0 0
        %1307 = vmatpush2.bf16.msra.mxu0 0
        %1308 = vmatprep.subr.bf16.mxu0 0
        %1309 = vmatpush2.bf16.msra.mxu0 0
        %1310 = vmatprep.subr.bf16.mxu0 0
        %1311 = vmatpush2.bf16.msra.mxu0 0
        %1312 = vmatprep.subr.bf16.mxu0 0
        %1313 = vmatpush2.bf16.msra.mxu0 0
        %1314 = vmatprep.subr.bf16.mxu0 0
        %1315 = vmatpush2.bf16.msra.mxu0 0
        %1316 = vmatprep.mubr.bf16.mxu0 0
        %1317 = vmatmul.mubr.bf16.gmra.mxu0 %v1282
        %v1318 = vpop.f32.mrf.mxu0
        %v1319 = vadd.f32 %v1267, %v1318
        %v1320 = vpop.f32.mrf.mxu0
        %v1321 = vpop.f32.mrf.mxu0
        %v1322 = vpop.f32.mrf.mxu0
        %1323 = vdwg.mxu0
        %v1324 = vmax.f32 %v1319, 0.0
        %v1325 = vpack.c.bf16 %v1324, %v1324
        %v1326 = vld [vmem:[%s574] sm:$0xf]
        %v1327 = vld [vmem:[%s574 + $0x4] sm:$0xf]
        %v1328 = vld [vmem:[%s574 + $0x8] sm:$0xf]
        %v1329 = vld [vmem:[%s574 + $0xc] sm:$0xf]
        %v1330 = vld [vmem:[%s574 + $0x10] sm:$0xf]
        %v1331 = vld [vmem:[%s574 + $0x14] sm:$0xf]
        %v1332 = vld [vmem:[%s574 + $0x18] sm:$0xf]
        %v1333 = vld [vmem:[%s574 + $0x1c] sm:$0xf]
        %v1335 = vlaneseq
        %v1336 = vshrl.u32 %v1335, 7
        %v1337 = vsub.s32 0, %v1336
        %v1338 = vrot.slane %v1230, %v1337
        %v1348 = vunpack.c.l.b16 %v1326
        %v1349 = vunpack.c.l.b16 %v1327
        %v1350 = vunpack.c.l.b16 %v1328
        %v1351 = vunpack.c.l.b16 %v1329
        %v1352 = vunpack.c.l.b16 %v1330
        %v1353 = vunpack.c.l.b16 %v1331
        %v1354 = vunpack.c.l.b16 %v1332
        %v1355 = vunpack.c.l.b16 %v1333
        %v1356 = vpack.c.b16 %v1349, %v1348
        %v1357 = vpack.c.b16 %v1351, %v1350
        %v1358 = vpack.c.b16 %v1353, %v1352
        %v1359 = vpack.c.b16 %v1355, %v1354
        %v1365 = vsel %vm1183, %v1325, 0
        %1367 = vmatprep.subr.bf16.mxu0 0
        %1368 = vmatpush1.bf16.msra.mxu0 0
        %1369 = vmatprep.subr.bf16.mxu0 0
        %1370 = vmatpush1.bf16.msra.mxu0 0
        %1371 = vmatprep.subr.bf16.mxu0 0
        %1372 = vmatpush1.bf16.msra.mxu0 0
        %1373 = vmatprep.subr.bf16.mxu0 0
        %1374 = vmatpush1.bf16.msra.mxu0 0
        %1375 = vmatprep.subr.bf16.mxu0 0
        %1376 = vmatpush1.bf16.msra.mxu0 %v1359
        %1377 = vmatprep.subr.bf16.mxu0 0
        %1378 = vmatpush1.bf16.msra.mxu0 %v1358
        %1379 = vmatprep.subr.bf16.mxu0 0
        %1380 = vmatpush1.bf16.msra.mxu0 %v1357
        %1381 = vmatprep.subr.bf16.mxu0 0
        %1382 = vmatpush1.bf16.msra.mxu0 %v1356
        %1383 = vmatprep.subr.bf16.mxu0 0
        %1384 = vmatpush2.bf16.msra.mxu0 0
        %1385 = vmatprep.subr.bf16.mxu0 0
        %1386 = vmatpush2.bf16.msra.mxu0 0
        %1387 = vmatprep.subr.bf16.mxu0 0
        %1388 = vmatpush2.bf16.msra.mxu0 0
        %1389 = vmatprep.subr.bf16.mxu0 0
        %1390 = vmatpush2.bf16.msra.mxu0 0
        %1391 = vmatprep.subr.bf16.mxu0 0
        %1392 = vmatpush2.bf16.msra.mxu0 0
        %1393 = vmatprep.subr.bf16.mxu0 0
        %1394 = vmatpush2.bf16.msra.mxu0 0
        %1395 = vmatprep.subr.bf16.mxu0 0
        %1396 = vmatpush2.bf16.msra.mxu0 0
        %1397 = vmatprep.subr.bf16.mxu0 0
        %1398 = vmatpush2.bf16.msra.mxu0 0
        %1399 = vmatprep.mubr.bf16.mxu0 0
        %1400 = vmatmul.mubr.bf16.gmra.mxu0 %v1365
        %v1401 = vpop.f32.mrf.mxu0
        %v1402 = vadd.f32 %v1338, %v1401
        %v1403 = vpop.f32.mrf.mxu0
        %v1404 = vpop.f32.mrf.mxu0
        %v1405 = vpop.f32.mrf.mxu0
        %1406 = vdwg.mxu0
        %v1407 = vadd.f32 %v1402, %v1222
        %1408 = vst.msk [vmem:[#allocation2] sm:$0xff] %vm589, %v1407
        %p1409 = scmp.eq.s32.totalorder %s33, 1
        // Predicated region
        $region73: #{tpu_custom_call.1} parent=63 // pred_check
          %p1410 = pneg %p1409
        $region74: #{tpu_custom_call.1} parent=63 // pred_check_branch
          %1412 = sbr.rel (%p1410) target = $region76
        $region75: #{tpu_custom_call.1} parent=63 // pred_region
          %1413 = vst.msk [vmem:[%s539] sm:$0xff] %vm589, %v1407
        $region76: #{tpu_custom_call.1} parent=63 // pred_fallthru
          _
        %s1414 = sand.u32 %s334, 1
        %s1415 = scalar_lea.sflag [#allocation5], %s1414
        %s1416 = sand.u32 %s334, 1
        %s1417 = smul.addr %s1416, 8
        %s1418 = scalar_lea.vmem [#allocation6], %s1417
        // Predicated region
        $region77: #{tpu_custom_call.1} parent=63 // pred_check
          %p1419 = pneg %p344
        $region78: #{tpu_custom_call.1} parent=63 // pred_check_branch
          %1421 = sbr.rel (%p1419) target = $region80
        $region79: #{tpu_custom_call.1} parent=63 // pred_region
          %s1423 = ssub.s32 128, 128
          %1424 = vsyncadd %s1415, %s1423
          %s1425 = smul.addr %s32, 128
          %s1426 = scalar_lea.hbm %s11, %s1425
          %s1428 = sshll.u32 %s1418, 4
          %s1429 = int_to_ptr.vmem [resolvable:$true] %s1428
          %1431 = dma.vmem_to_hbm [thread:$0]  %s1429, 128, %s1426, %s1415
        $region80: #{tpu_custom_call.1} parent=63 // pred_fallthru
          _
      $region64: #{tpu_custom_call.1} parent=5 // pred_fallthru
        _
      %p1432 = scmp.le.s32.totalorder 2, %s23
      // Predicated region
      $region81: #{tpu_custom_call.1} parent=5 // pred_check
        %p1433 = pneg %p1432
      $region82: #{tpu_custom_call.1} parent=5 // pred_check_branch
        %1435 = sbr.rel (%p1433) target = $region84
      $region83: #{tpu_custom_call.1} parent=5 // pred_region
        %s1436 = ssub.s32 %s23, 2
        // Predicated region
        $region85: #{tpu_custom_call.1} parent=83 // pred_check
          %p1437 = pneg %p350
        $region86: #{tpu_custom_call.1} parent=83 // pred_check_branch
          %1439 = sbr.rel (%p1437) target = $region88
        $region87: #{tpu_custom_call.1} parent=83 // pred_region
          %s1440 = sand.u32 %s335, 1
          %s1441 = scalar_lea.sflag [#allocation5], %s1440
          %s1442 = sand.u32 %s335, 1
          %s1443 = smul.addr %s1442, 8
          %s1444 = scalar_lea.vmem [#allocation6], %s1443
          %1445 = dma.done %s1441, 128
        $region88: #{tpu_custom_call.1} parent=83 // pred_fallthru
          _
      $region84: #{tpu_custom_call.1} parent=5 // pred_fallthru
        _
    $region6: #{tpu_custom_call.1} parent=1 // loop_footer
      %s27 = sadd.s32 1, %s23
    $region7: #{tpu_custom_call.1} parent=1 // loop_footer_branch
      %22 = sbr.rel target = $region3
    $region8: #{tpu_custom_call.1} parent=1 // loop_exit
      _
    %1446 = vsyncpa [#allocation4], 1
    %s1447 = scalar_lea.sflag [#allocation4], 1
    %1448 = vsyncpa %s1447, 1
    %1449 = vsyncpa [#allocation5], 1
    %s1450 = scalar_lea.sflag [#allocation5], 1
    %1451 = vsyncpa %s1450, 1

</llo_original>
